<compile_context>
chip_gen: v6e
topology: v6e:2x2x1
jax: 0.10.0
libtpu: 0.0.40
codegen_flags: <defaults>
</compile_context>

<pallas_src>
import functools
import math

import jax
import jax.numpy as jnp
import numpy as np
from jax.experimental import pallas as pl
from jax.experimental.pallas import tpu as pltpu


def _pinn_kernel(x_ref, w_in_ref, b_in_ref, w_hid_ref, b_hid_ref,
                 w_out_ref, b_out_ref, o_ref, *, depth):
    """One batch tile.  Activations are (features, tile_b): batch on lanes."""
    x = x_ref[...]                       # (in_size, tile_b)

    # Hoist the (tiny) hidden weight/bias stacks out of the unrolled loop.
    w_hid = w_hid_ref[...]               # (depth, hidden, hidden)
    b_hid = b_hid_ref[...]               # (depth, hidden, 1)

    # Input layer + tanh:  h^T = tanh(W_in @ x^T + b_in)
    h = jnp.tanh(
        jnp.dot(w_in_ref[...], x, preferred_element_type=jnp.float32)
        + b_in_ref[...]
    )
    # Hidden layers + tanh (statically unrolled; depth is small and static).
    for d in range(depth):
        h = jnp.tanh(
            jnp.dot(w_hid[d], h, preferred_element_type=jnp.float32)
            + b_hid[d]
        )
    # Output layer (no activation); the bias add is the dot epilogue.
    out = (
        jnp.dot(w_out_ref[...], h, preferred_element_type=jnp.float32)
        + b_out_ref[...]
    )
    o_ref[...] = out.astype(o_ref.dtype)


def _round_up(x, m):
    return ((x + m - 1) // m) * m


def _choose_tile_b(batch, max_tile=8192, min_tile=512):
    """Pick the batch-tile width (lane axis).

    Big tiles (up to 8192 f32 columns) amortize per-grid-step overhead and tiny
    DMAs; for larger batches keep >= 2 grid steps so the "parallel" grid axis
    can shard across both TensorCores on v7x.  VMEM cost is only a few MiB even
    at the maximum tile, so no vmem_limit override is needed on any generation.
    """
    b_up = _round_up(batch, 256)
    if b_up <= min_tile:
        return b_up
    two_way = _round_up((b_up + 1) // 2, 256)
    return max(min(max_tile, two_way), min_tile)


def pinn_forward(x, params, *, depth, tile_b=None):
    """PINN forward pass with a single fused Pallas TPU kernel.

    x: (B, input_size) float32.  Returns (B, output_size) float32.
    """
    w_in, b_in, w_hid, b_hid, w_out, b_out = params
    B, in_size = x.shape
    hidden = w_in.shape[0]
    out_size = w_out.shape[0]

    if tile_b is None:
        tile_b = _choose_tile_b(B)
    num_tiles = pl.cdiv(B, tile_b)
    b_cols = num_tiles * tile_b          # logical (padded) column count

    # Single small layout op: (B, in) -> (in, B) so the batch rides the lane
    # axis inside the kernel.  Under jit this is one fused 8*B-byte copy.
    x_t = x.T

    kernel = functools.partial(_pinn_kernel, depth=depth)

    flops = 2 * b_cols * (in_size * hidden
                          + depth * hidden * hidden
                          + hidden * out_size)
    transcendentals = b_cols * hidden * (depth + 1)
    bytes_accessed = 4 * (in_size * b_cols + out_size * b_cols
                          + w_in.size + b_in.size + w_hid.size + b_hid.size
                          + w_out.size + b_out.size)

    out_t = pl.pallas_call(
        kernel,
        out_shape=jax.ShapeDtypeStruct((out_size, B), x.dtype),
        grid_spec=pl.GridSpec(
            grid=(num_tiles,),
            in_specs=[
                pl.BlockSpec((in_size, tile_b), lambda i: (0, i)),           # x^T tile
                pl.BlockSpec((hidden, in_size), lambda i: (0, 0)),           # W_in (out,in)
                pl.BlockSpec((hidden, 1), lambda i: (0, 0)),                 # b_in
                pl.BlockSpec((depth, hidden, hidden), lambda i: (0, 0, 0)),  # W_hid stack
                pl.BlockSpec((depth, hidden, 1), lambda i: (0, 0, 0)),       # b_hid stack
                pl.BlockSpec((out_size, hidden), lambda i: (0, 0)),          # W_out
                pl.BlockSpec((out_size, 1), lambda i: (0, 0)),               # b_out
            ],
            out_specs=pl.BlockSpec((out_size, tile_b), lambda i: (0, i)),    # lane-dense out^T
        ),
        compiler_params=pltpu.CompilerParams(
            dimension_semantics=("parallel",),   # batch grid shards across TCs on v7x
        ),
        cost_estimate=pl.CostEstimate(
            flops=flops,
            transcendentals=transcendentals,
            bytes_accessed=bytes_accessed,
        ),
    )(x_t, w_in, b_in, w_hid, b_hid, w_out, b_out)

    # (out_size, B) -> PyTorch-facing (B, out_size); free reshape for out_size==1.
    return out_t.T


def init_pinn_params(key, input_size, hidden_size, output_size, depth,
                     dtype=jnp.float32):
    """Matches the PyTorch module: xavier_normal_ weights, zero biases.
    Weights are PyTorch-native (out_features, in_features); biases are stored
    as (out_features, 1) so they broadcast along the lane (batch) axis."""
    def xavier_normal(k, fan_out, fan_in):
        std = math.sqrt(2.0 / (fan_in + fan_out))
        return (jax.random.normal(k, (fan_out, fan_in)) * std).astype(dtype)

    keys = jax.random.split(key, depth + 2)
    w_in = xavier_normal(keys[0], hidden_size, input_size)
    b_in = jnp.zeros((hidden_size, 1), dtype)
    w_hid = jnp.stack(
        [xavier_normal(keys[1 + d], hidden_size, hidden_size) for d in range(depth)]
    )
    b_hid = jnp.zeros((depth, hidden_size, 1), dtype)
    w_out = xavier_normal(keys[depth + 1], output_size, hidden_size)
    b_out = jnp.zeros((output_size, 1), dtype)
    return (w_in, b_in, w_hid, b_hid, w_out, b_out)


def pinn_reference_np(x, params, depth):
    """NumPy float64 reference of the same forward pass (PyTorch semantics)."""
    w_in, b_in, w_hid, b_hid, w_out, b_out = [
        np.asarray(p, dtype=np.float64) for p in params]
    h = np.tanh(np.asarray(x, np.float64) @ w_in.T + b_in.T)
    for d in range(depth):
        h = np.tanh(h @ w_hid[d].T + b_hid[d].T)
    return h @ w_out.T + b_out.T


if __name__ == "__main__":
    # Typical PINN sizes: x = (x, t) coordinates, 1 scalar output.
    input_size, hidden_size, output_size, depth = 2, 32, 1, 3

    key = jax.random.PRNGKey(0)
    k_param, k_x1, k_x2 = jax.random.split(key, 3)
    params = init_pinn_params(k_param, input_size, hidden_size, output_size, depth)

    fwd = jax.jit(functools.partial(pinn_forward, depth=depth))

    # Tolerance note: 5e-3 on ~0.4-magnitude outputs covers possible reduced-
    # precision (bf16-pass) f32 MXU rounding on either side while still being
    # ~100x below the signal, so it validates the forward-pass semantics.
    tol = 5e-3

    # Batch that gives 2 grid steps with a ragged last block (tile_b=512).
    x = jax.random.normal(k_x1, (600, input_size), dtype=jnp.float32)
    out = jax.block_until_ready(fwd(x, params))
    ref = pinn_reference_np(x, params, depth).astype(np.float32)
    assert out.shape == (600, output_size)
    assert float(jnp.max(jnp.abs(out - ref))) < tol

    # Exact-multiple batch (single full tile).
    x2 = jax.random.normal(k_x2, (512, input_size), dtype=jnp.float32)
    out2 = jax.block_until_ready(fwd(x2, params))
    ref2 = pinn_reference_np(x2, params, depth).astype(np.float32)
    assert out2.shape == (512, output_size)
    assert float(jnp.max(jnp.abs(out2 - ref2))) < tol

    print("KERNEL_OK")
</pallas_src>

<mosaic_0001>
module attributes {stable_mosaic.version = 11 : i64} {
  func.func @_pinn_kernel(%arg0: i32, %arg1: memref<2x512xf32, #tpu.memory_space<vmem>>, %arg2: memref<32x2xf32, #tpu.memory_space<vmem>>, %arg3: memref<32x1xf32, #tpu.memory_space<vmem>>, %arg4: memref<3x32x32xf32, #tpu.memory_space<vmem>>, %arg5: memref<3x32x1xf32, #tpu.memory_space<vmem>>, %arg6: memref<1x32xf32, #tpu.memory_space<vmem>>, %arg7: memref<1x1xf32, #tpu.memory_space<vmem>>, %arg8: memref<1x512xf32, #tpu.memory_space<vmem>>) attributes {dimension_semantics = [#tpu.dimension_semantics<parallel>], iteration_bounds = array<i64: 2>, scalar_prefetch = 0 : i64, scratch_operands = 0 : i64, tpu.core_type = #tpu.core_type<tc>, window_params = [{transform_indices = @transform_0, window_bounds = array<i64: 2, 512>}, {pipeline_mode = #tpu.pipeline_mode<synchronous>, transform_indices = @transform_1, window_bounds = array<i64: 32, 2>}, {pipeline_mode = #tpu.pipeline_mode<synchronous>, transform_indices = @transform_2, window_bounds = array<i64: 32, 1>}, {pipeline_mode = #tpu.pipeline_mode<synchronous>, transform_indices = @transform_3, window_bounds = array<i64: 3, 32, 32>}, {pipeline_mode = #tpu.pipeline_mode<synchronous>, transform_indices = @transform_4, window_bounds = array<i64: 3, 32, 1>}, {pipeline_mode = #tpu.pipeline_mode<synchronous>, transform_indices = @transform_5, window_bounds = array<i64: 1, 32>}, {pipeline_mode = #tpu.pipeline_mode<synchronous>, transform_indices = @transform_6, window_bounds = array<i64: 1, 1>}, {transform_indices = @transform_7, window_bounds = array<i64: 1, 512>}]} {
    %c0 = arith.constant 0 : index
    %c0_0 = arith.constant 0 : index
    %0 = vector.load %arg1[%c0, %c0_0] : memref<2x512xf32, #tpu.memory_space<vmem>>, vector<2x512xf32>
    %c0_1 = arith.constant 0 : index
    %c0_2 = arith.constant 0 : index
    %c0_3 = arith.constant 0 : index
    %1 = vector.load %arg4[%c0_1, %c0_2, %c0_3] : memref<3x32x32xf32, #tpu.memory_space<vmem>>, vector<3x32x32xf32>
    %c0_4 = arith.constant 0 : index
    %c0_5 = arith.constant 0 : index
    %c0_6 = arith.constant 0 : index
    %2 = vector.load %arg5[%c0_4, %c0_5, %c0_6] : memref<3x32x1xf32, #tpu.memory_space<vmem>>, vector<3x32x1xf32>
    %c0_7 = arith.constant 0 : index
    %c0_8 = arith.constant 0 : index
    %3 = vector.load %arg2[%c0_7, %c0_8] : memref<32x2xf32, #tpu.memory_space<vmem>>, vector<32x2xf32>
    %cst = arith.constant dense<0.000000e+00> : vector<32x512xf32>
    %4 = tpu.matmul %3, %0, %cst {dimension_numbers = #tpu.dot_dimension_numbers<[1], [0], [0], [1], [0, 0, 1, 1], [], []>} : vector<32x2xf32>, vector<2x512xf32>, vector<32x512xf32> -> vector<32x512xf32>
    %c0_9 = arith.constant 0 : index
    %c0_10 = arith.constant 0 : index
    %5 = vector.load %arg3[%c0_9, %c0_10] : memref<32x1xf32, #tpu.memory_space<vmem>>, vector<32x1xf32>
    %6 = vector.broadcast %5 : vector<32x1xf32> to vector<32x512xf32>
    %7 = arith.addf %4, %6 : vector<32x512xf32>
    %8 = math.tanh %7 : vector<32x512xf32>
    %9 = vector.extract_strided_slice %1 {offsets = [0, 0, 0], sizes = [1, 32, 32], strides = [1, 1, 1]} : vector<3x32x32xf32> to vector<1x32x32xf32>
    %10 = vector.shape_cast %9 : vector<1x32x32xf32> to vector<32x32xf32>
    %cst_11 = arith.constant dense<0.000000e+00> : vector<32x512xf32>
    %11 = tpu.matmul %10, %8, %cst_11 {dimension_numbers = #tpu.dot_dimension_numbers<[1], [0], [0], [1], [0, 0, 1, 1], [], []>} : vector<32x32xf32>, vector<32x512xf32>, vector<32x512xf32> -> vector<32x512xf32>
    %12 = vector.extract_strided_slice %2 {offsets = [0, 0, 0], sizes = [1, 32, 1], strides = [1, 1, 1]} : vector<3x32x1xf32> to vector<1x32x1xf32>
    %13 = vector.shape_cast %12 : vector<1x32x1xf32> to vector<32x1xf32>
    %14 = vector.broadcast %13 : vector<32x1xf32> to vector<32x512xf32>
    %15 = arith.addf %11, %14 : vector<32x512xf32>
    %16 = math.tanh %15 : vector<32x512xf32>
    %17 = vector.extract_strided_slice %1 {offsets = [1, 0, 0], sizes = [1, 32, 32], strides = [1, 1, 1]} : vector<3x32x32xf32> to vector<1x32x32xf32>
    %18 = vector.shape_cast %17 : vector<1x32x32xf32> to vector<32x32xf32>
    %cst_12 = arith.constant dense<0.000000e+00> : vector<32x512xf32>
    %19 = tpu.matmul %18, %16, %cst_12 {dimension_numbers = #tpu.dot_dimension_numbers<[1], [0], [0], [1], [0, 0, 1, 1], [], []>} : vector<32x32xf32>, vector<32x512xf32>, vector<32x512xf32> -> vector<32x512xf32>
    %20 = vector.extract_strided_slice %2 {offsets = [1, 0, 0], sizes = [1, 32, 1], strides = [1, 1, 1]} : vector<3x32x1xf32> to vector<1x32x1xf32>
    %21 = vector.shape_cast %20 : vector<1x32x1xf32> to vector<32x1xf32>
    %22 = vector.broadcast %21 : vector<32x1xf32> to vector<32x512xf32>
    %23 = arith.addf %19, %22 : vector<32x512xf32>
    %24 = math.tanh %23 : vector<32x512xf32>
    %25 = vector.extract_strided_slice %1 {offsets = [2, 0, 0], sizes = [1, 32, 32], strides = [1, 1, 1]} : vector<3x32x32xf32> to vector<1x32x32xf32>
    %26 = vector.shape_cast %25 : vector<1x32x32xf32> to vector<32x32xf32>
    %cst_13 = arith.constant dense<0.000000e+00> : vector<32x512xf32>
    %27 = tpu.matmul %26, %24, %cst_13 {dimension_numbers = #tpu.dot_dimension_numbers<[1], [0], [0], [1], [0, 0, 1, 1], [], []>} : vector<32x32xf32>, vector<32x512xf32>, vector<32x512xf32> -> vector<32x512xf32>
    %28 = vector.extract_strided_slice %2 {offsets = [2, 0, 0], sizes = [1, 32, 1], strides = [1, 1, 1]} : vector<3x32x1xf32> to vector<1x32x1xf32>
    %29 = vector.shape_cast %28 : vector<1x32x1xf32> to vector<32x1xf32>
    %30 = vector.broadcast %29 : vector<32x1xf32> to vector<32x512xf32>
    %31 = arith.addf %27, %30 : vector<32x512xf32>
    %32 = math.tanh %31 : vector<32x512xf32>
    %c0_14 = arith.constant 0 : index
    %c0_15 = arith.constant 0 : index
    %33 = vector.load %arg6[%c0_14, %c0_15] : memref<1x32xf32, #tpu.memory_space<vmem>>, vector<1x32xf32>
    %cst_16 = arith.constant dense<0.000000e+00> : vector<1x512xf32>
    %34 = tpu.matmul %33, %32, %cst_16 {dimension_numbers = #tpu.dot_dimension_numbers<[1], [0], [0], [1], [0, 0, 1, 1], [], []>} : vector<1x32xf32>, vector<32x512xf32>, vector<1x512xf32> -> vector<1x512xf32>
    %c0_17 = arith.constant 0 : index
    %c0_18 = arith.constant 0 : index
    %35 = vector.load %arg7[%c0_17, %c0_18] : memref<1x1xf32, #tpu.memory_space<vmem>>, vector<1x1xf32>
    %36 = vector.broadcast %35 : vector<1x1xf32> to vector<1x512xf32>
    %37 = arith.addf %34, %36 : vector<1x512xf32>
    %c0_19 = arith.constant 0 : index
    %c0_20 = arith.constant 0 : index
    %38 = vector.load %arg8[%c0_19, %c0_20] : memref<1x512xf32, #tpu.memory_space<vmem>>, vector<1x512xf32>
    tpu.vector_store %arg8[%c0_19, %c0_20], %37 {strides = array<i32>} : memref<1x512xf32, #tpu.memory_space<vmem>>, vector<1x512xf32>,
    return
  }
  func.func @transform_0(%arg0: i32) -> (i32, i32) {
    %c0_i32 = arith.constant 0 : i32
    %c0_i32_0 = arith.constant 0 : i32
    return %c0_i32, %arg0 : i32, i32
  }
  func.func @transform_1(%arg0: i32) -> (i32, i32) {
    %c0_i32 = arith.constant 0 : i32
    %c0_i32_0 = arith.constant 0 : i32
    %c0_i32_1 = arith.constant 0 : i32
    return %c0_i32, %c0_i32_0 : i32, i32
  }
  func.func @transform_2(%arg0: i32) -> (i32, i32) {
    %c0_i32 = arith.constant 0 : i32
    %c0_i32_0 = arith.constant 0 : i32
    %c0_i32_1 = arith.constant 0 : i32
    return %c0_i32, %c0_i32_0 : i32, i32
  }
  func.func @transform_3(%arg0: i32) -> (i32, i32, i32) {
    %c0_i32 = arith.constant 0 : i32
    %c0_i32_0 = arith.constant 0 : i32
    %c0_i32_1 = arith.constant 0 : i32
    %c0_i32_2 = arith.constant 0 : i32
    return %c0_i32, %c0_i32_0, %c0_i32_1 : i32, i32, i32
  }
  func.func @transform_4(%arg0: i32) -> (i32, i32, i32) {
    %c0_i32 = arith.constant 0 : i32
    %c0_i32_0 = arith.constant 0 : i32
    %c0_i32_1 = arith.constant 0 : i32
    %c0_i32_2 = arith.constant 0 : i32
    return %c0_i32, %c0_i32_0, %c0_i32_1 : i32, i32, i32
  }
  func.func @transform_5(%arg0: i32) -> (i32, i32) {
    %c0_i32 = arith.constant 0 : i32
    %c0_i32_0 = arith.constant 0 : i32
    %c0_i32_1 = arith.constant 0 : i32
    return %c0_i32, %c0_i32_0 : i32, i32
  }
  func.func @transform_6(%arg0: i32) -> (i32, i32) {
    %c0_i32 = arith.constant 0 : i32
    %c0_i32_0 = arith.constant 0 : i32
    %c0_i32_1 = arith.constant 0 : i32
    return %c0_i32, %c0_i32_0 : i32, i32
  }
  func.func @transform_7(%arg0: i32) -> (i32, i32) {
    %c0_i32 = arith.constant 0 : i32
    %c0_i32_0 = arith.constant 0 : i32
    return %c0_i32, %arg0 : i32, i32
  }
}

</mosaic_0001>

<llo_original>
// kernel: pinn_forward.1
$region0: #{pinn_forward.1}
  #allocation0 [shape = 'u32[]', space=smem, size = 0x4, offset = 0x4, fixed_abs, tag = 'smem constant byte address 0x4 - core index']
  #allocation1 [shape = 'u32[144,128]{1,0:T(1,128)}', space=vmem, size = 0x12000, scoped, tag = 'internal scratch']
  #allocation2 [shape = 'f32[1,1]{1,0:T(1,128)S(1)}', space=vmem, size = 0x200, scoped, tag = 'scoped memory for pinn_forward.1']
  %s0 = inlined_call_operand.vmem [shape: f32[2,600], index: 0, kind: input, shape index: {}]
  %s1 = inlined_call_operand.vmem [shape: f32[32,2], index: 1, kind: input, shape index: {}]
  %s2 = inlined_call_operand.vmem [shape: f32[32,1], index: 2, kind: input, shape index: {}]
  %s3 = inlined_call_operand.vmem [shape: f32[3,32,32], index: 3, kind: input, shape index: {}]
  %s4 = inlined_call_operand.vmem [shape: f32[3,32,1], index: 4, kind: input, shape index: {}]
  %s5 = inlined_call_operand.vmem [shape: f32[1,32], index: 5, kind: input, shape index: {}]
  %s6 = inlined_call_operand.<no memory space> [shape: f32[1,1], index: 6, kind: input, shape index: {}]
  %s7 = inlined_call_operand.hbm [shape: f32[1,600], index: 7, kind: output, shape index: {}]
  %s8 = sld [smem:[#allocation0]]
  $region61: #{pinn_forward.1} parent=0
    _
  %s10 = ssub.s32 1, %s8
  %s11 = scalar_select 0, %s10, %s8
  %v12 = vstv %s6
  %13 = vst [vmem:[#allocation2] sm:$0x1] %v12
  $region1: #{pinn_forward.1} parent=0
    #allocation3 [shape = 'u8[4096]{0}', space=vmem, size = 0x1000, scoped, tag = 'output window, operand 0']
    #allocation4 [shape = 's32[2]{0}', space=sflag, size = 0x8, scoped, tag = 'scoped memory for pinn_forward.1']
    %14 = vsyncpa [#allocation4], 0
    %s15 = scalar_lea.sflag [#allocation4], 1
    %16 = vsyncpa %s15, 0
    loop: start=0, step=1, limit=4
    $region2: #{pinn_forward.1} parent=1 // loop_pre_header
      _
    $region3: #{pinn_forward.1} parent=1 // loop_header
      %s18 = sphi 0, %s22
      %p19 = scmp.ge.s32.totalorder %s18, 4
      %s28 = sphi 0, %s30
      %s31 = sphi 0, %s28
      %s32 = sphi 0, %s31
      %s48 = sphi 0, %s32
      %s52 = sphi 0, %s52
      %s54 = sphi 0, %s52
      %s55 = sphi 0, %s54
      %s69 = sphi 0, %s55
      %s73 = sphi 0, %s73
      %s75 = sphi 0, %s73
      %s76 = sphi 0, %s75
      %s90 = sphi 0, %s76
      %s94 = sphi 0, %s94
      %s96 = sphi 0, %s94
      %s97 = sphi 0, %s96
      %s111 = sphi 0, %s97
      %s115 = sphi 0, %s115
      %s117 = sphi 0, %s115
      %s118 = sphi 0, %s117
      %s132 = sphi 0, %s118
      %s136 = sphi 0, %s136
      %s138 = sphi 0, %s136
      %s139 = sphi 0, %s138
      %s153 = sphi 0, %s139
      %s157 = sphi 0, %s157
      %s159 = sphi 0, %s157
      %s160 = sphi 0, %s159
      %s174 = sphi 0, %s160
      %s180 = sphi 0, %s182
      %s183 = sphi 0, %s180
      %s184 = sphi 0, %s183
      %s200 = sphi 0, %s184
    $region4: #{pinn_forward.1} parent=1 // loop_header_branch
      %21 = sbr.rel (%p19) target = $region8
    $region5: #{pinn_forward.1} parent=1 // loop_body
      %s23 = ssub.s32 %s18, 1
      %s24 = ssub.s32 %s18, 2
      %s25 = sadd.s32 %s18, 1
      %s26 = ssub.s32 %s18, %s25
      %p27 = scmp.eq.s32.totalorder %s26, 0
      %s29 = sadd.s32 %s28, 1
      %s30 = scalar_select %p27, %s28, %s29
      %p33 = pneg %p27
      %p34 = scmp.eq.s32.totalorder %s18, 1
      %p35 = por %p33, %p34
      %p36 = scmp.ne.s32.totalorder %s28, %s31
      %p37 = scmp.eq.s32.totalorder %s18, 0
      %p38 = por %p36, %p37
      %p39 = scmp.ne.s32.totalorder %s28, %s31
      %p40 = scmp.eq.s32.totalorder %s23, 1
      %p41 = por %p39, %p40
      %p42 = scmp.ne.s32.totalorder %s31, %s32
      %p43 = scmp.eq.s32.totalorder %s23, 0
      %p44 = por %p42, %p43
      %p45 = scmp.ne.s32.totalorder %s31, %s32
      %p46 = scmp.eq.s32.totalorder %s24, 1
      %p47 = por %p45, %p46
      %p49 = scmp.ne.s32.totalorder %s32, %s48
      %p50 = scmp.eq.s32.totalorder %s24, 0
      %p51 = por %p49, %p50
      %s53 = sadd.s32 %s52, 1
      %p56 = scmp.eq.s32.totalorder %s18, 1
      %p57 = scmp.ne.s32.totalorder %s52, %s54
      %p58 = scmp.eq.s32.totalorder %s18, 0
      %p59 = por %p57, %p58
      %p60 = scmp.ne.s32.totalorder %s52, %s54
      %p61 = scmp.eq.s32.totalorder %s23, 1
      %p62 = por %p60, %p61
      %p63 = scmp.ne.s32.totalorder %s54, %s55
      %p64 = scmp.eq.s32.totalorder %s23, 0
      %p65 = por %p63, %p64
      %p66 = scmp.ne.s32.totalorder %s54, %s55
      %p67 = scmp.eq.s32.totalorder %s24, 1
      %p68 = por %p66, %p67
      %p70 = scmp.ne.s32.totalorder %s55, %s69
      %p71 = scmp.eq.s32.totalorder %s24, 0
      %p72 = por %p70, %p71
      %s74 = sadd.s32 %s73, 1
      %p77 = scmp.eq.s32.totalorder %s18, 1
      %p78 = scmp.ne.s32.totalorder %s73, %s75
      %p79 = scmp.eq.s32.totalorder %s18, 0
      %p80 = por %p78, %p79
      %p81 = scmp.ne.s32.totalorder %s73, %s75
      %p82 = scmp.eq.s32.totalorder %s23, 1
      %p83 = por %p81, %p82
      %p84 = scmp.ne.s32.totalorder %s75, %s76
      %p85 = scmp.eq.s32.totalorder %s23, 0
      %p86 = por %p84, %p85
      %p87 = scmp.ne.s32.totalorder %s75, %s76
      %p88 = scmp.eq.s32.totalorder %s24, 1
      %p89 = por %p87, %p88
      %p91 = scmp.ne.s32.totalorder %s76, %s90
      %p92 = scmp.eq.s32.totalorder %s24, 0
      %p93 = por %p91, %p92
      %s95 = sadd.s32 %s94, 1
      %p98 = scmp.eq.s32.totalorder %s18, 1
      %p99 = scmp.ne.s32.totalorder %s94, %s96
      %p100 = scmp.eq.s32.totalorder %s18, 0
      %p101 = por %p99, %p100
      %p102 = scmp.ne.s32.totalorder %s94, %s96
      %p103 = scmp.eq.s32.totalorder %s23, 1
      %p104 = por %p102, %p103
      %p105 = scmp.ne.s32.totalorder %s96, %s97
      %p106 = scmp.eq.s32.totalorder %s23, 0
      %p107 = por %p105, %p106
      %p108 = scmp.ne.s32.totalorder %s96, %s97
      %p109 = scmp.eq.s32.totalorder %s24, 1
      %p110 = por %p108, %p109
      %p112 = scmp.ne.s32.totalorder %s97, %s111
      %p113 = scmp.eq.s32.totalorder %s24, 0
      %p114 = por %p112, %p113
      %s116 = sadd.s32 %s115, 1
      %p119 = scmp.eq.s32.totalorder %s18, 1
      %p120 = scmp.ne.s32.totalorder %s115, %s117
      %p121 = scmp.eq.s32.totalorder %s18, 0
      %p122 = por %p120, %p121
      %p123 = scmp.ne.s32.totalorder %s115, %s117
      %p124 = scmp.eq.s32.totalorder %s23, 1
      %p125 = por %p123, %p124
      %p126 = scmp.ne.s32.totalorder %s117, %s118
      %p127 = scmp.eq.s32.totalorder %s23, 0
      %p128 = por %p126, %p127
      %p129 = scmp.ne.s32.totalorder %s117, %s118
      %p130 = scmp.eq.s32.totalorder %s24, 1
      %p131 = por %p129, %p130
      %p133 = scmp.ne.s32.totalorder %s118, %s132
      %p134 = scmp.eq.s32.totalorder %s24, 0
      %p135 = por %p133, %p134
      %s137 = sadd.s32 %s136, 1
      %p140 = scmp.eq.s32.totalorder %s18, 1
      %p141 = scmp.ne.s32.totalorder %s136, %s138
      %p142 = scmp.eq.s32.totalorder %s18, 0
      %p143 = por %p141, %p142
      %p144 = scmp.ne.s32.totalorder %s136, %s138
      %p145 = scmp.eq.s32.totalorder %s23, 1
      %p146 = por %p144, %p145
      %p147 = scmp.ne.s32.totalorder %s138, %s139
      %p148 = scmp.eq.s32.totalorder %s23, 0
      %p149 = por %p147, %p148
      %p150 = scmp.ne.s32.totalorder %s138, %s139
      %p151 = scmp.eq.s32.totalorder %s24, 1
      %p152 = por %p150, %p151
      %p154 = scmp.ne.s32.totalorder %s139, %s153
      %p155 = scmp.eq.s32.totalorder %s24, 0
      %p156 = por %p154, %p155
      %s158 = sadd.s32 %s157, 1
      %p161 = scmp.eq.s32.totalorder %s18, 1
      %p162 = scmp.ne.s32.totalorder %s157, %s159
      %p163 = scmp.eq.s32.totalorder %s18, 0
      %p164 = por %p162, %p163
      %p165 = scmp.ne.s32.totalorder %s157, %s159
      %p166 = scmp.eq.s32.totalorder %s23, 1
      %p167 = por %p165, %p166
      %p168 = scmp.ne.s32.totalorder %s159, %s160
      %p169 = scmp.eq.s32.totalorder %s23, 0
      %p170 = por %p168, %p169
      %p171 = scmp.ne.s32.totalorder %s159, %s160
      %p172 = scmp.eq.s32.totalorder %s24, 1
      %p173 = por %p171, %p172
      %p175 = scmp.ne.s32.totalorder %s160, %s174
      %p176 = scmp.eq.s32.totalorder %s24, 0
      %p177 = por %p175, %p176
      %s178 = ssub.s32 %s18, %s25
      %p179 = scmp.eq.s32.totalorder %s178, 0
      %s181 = sadd.s32 %s180, 1
      %s182 = scalar_select %p179, %s180, %s181
      %p185 = pneg %p179
      %p186 = scmp.eq.s32.totalorder %s18, 1
      %p187 = por %p185, %p186
      %p188 = scmp.ne.s32.totalorder %s180, %s183
      %p189 = scmp.eq.s32.totalorder %s18, 0
      %p190 = por %p188, %p189
      %p191 = scmp.ne.s32.totalorder %s180, %s183
      %p192 = scmp.eq.s32.totalorder %s23, 1
      %p193 = por %p191, %p192
      %p194 = scmp.ne.s32.totalorder %s183, %s184
      %p195 = scmp.eq.s32.totalorder %s23, 0
      %p196 = por %p194, %p195
      %p197 = scmp.ne.s32.totalorder %s183, %s184
      %p198 = scmp.eq.s32.totalorder %s24, 1
      %p199 = por %p197, %p198
      %p201 = scmp.ne.s32.totalorder %s184, %s200
      %p202 = scmp.eq.s32.totalorder %s24, 0
      %p203 = por %p201, %p202
      %p204 = scmp.le.s32.totalorder 1, %s18
      %p205 = scmp.lt.s32.totalorder %s18, 3
      %p206 = pnand %p204, %p205
      %p207 = pneg %p206
      // Predicated region
      $region9: #{pinn_forward.1} parent=5 // pred_check
        _
      $region10: #{pinn_forward.1} parent=5 // pred_check_branch
        %209 = sbr.rel (%p206) target = $region12
      $region11: #{pinn_forward.1} parent=5 // pred_region
        %s210 = ssub.s32 %s18, 1
        // Predicated region
        $region13: #{pinn_forward.1} parent=11 // pred_check
          %p211 = pneg %p65
        $region14: #{pinn_forward.1} parent=11 // pred_check_branch
          %213 = sbr.rel (%p211) target = $region16
        $region15: #{pinn_forward.1} parent=11 // pred_region
          _
        $region16: #{pinn_forward.1} parent=11 // pred_fallthru
          _
        // Predicated region
        $region17: #{pinn_forward.1} parent=11 // pred_check
          %p214 = pneg %p86
        $region18: #{pinn_forward.1} parent=11 // pred_check_branch
          %216 = sbr.rel (%p214) target = $region20
        $region19: #{pinn_forward.1} parent=11 // pred_region
          _
        $region20: #{pinn_forward.1} parent=11 // pred_fallthru
          _
        // Predicated region
        $region21: #{pinn_forward.1} parent=11 // pred_check
          %p217 = pneg %p107
        $region22: #{pinn_forward.1} parent=11 // pred_check_branch
          %219 = sbr.rel (%p217) target = $region24
        $region23: #{pinn_forward.1} parent=11 // pred_region
          _
        $region24: #{pinn_forward.1} parent=11 // pred_fallthru
          _
        // Predicated region
        $region25: #{pinn_forward.1} parent=11 // pred_check
          %p220 = pneg %p128
        $region26: #{pinn_forward.1} parent=11 // pred_check_branch
          %222 = sbr.rel (%p220) target = $region28
        $region27: #{pinn_forward.1} parent=11 // pred_region
          _
        $region28: #{pinn_forward.1} parent=11 // pred_fallthru
          _
        // Predicated region
        $region29: #{pinn_forward.1} parent=11 // pred_check
          %p223 = pneg %p149
        $region30: #{pinn_forward.1} parent=11 // pred_check_branch
          %225 = sbr.rel (%p223) target = $region32
        $region31: #{pinn_forward.1} parent=11 // pred_region
          _
        $region32: #{pinn_forward.1} parent=11 // pred_fallthru
          _
        // Predicated region
        $region33: #{pinn_forward.1} parent=11 // pred_check
          %p226 = pneg %p170
        $region34: #{pinn_forward.1} parent=11 // pred_check_branch
          %228 = sbr.rel (%p226) target = $region36
        $region35: #{pinn_forward.1} parent=11 // pred_region
          _
        $region36: #{pinn_forward.1} parent=11 // pred_fallthru
          _
      $region12: #{pinn_forward.1} parent=5 // pred_fallthru
        _
      %p229 = scmp.lt.s32.totalorder %s18, 2
      // Predicated region
      $region37: #{pinn_forward.1} parent=5 // pred_check
        %p230 = pneg %p229
      $region38: #{pinn_forward.1} parent=5 // pred_check_branch
        %232 = sbr.rel (%p230) target = $region40
      $region39: #{pinn_forward.1} parent=5 // pred_region
        // Predicated region
        $region41: #{pinn_forward.1} parent=39 // pred_check
          %p233 = pneg %p38
        $region42: #{pinn_forward.1} parent=39 // pred_check_branch
          %235 = sbr.rel (%p233) target = $region44
        $region43: #{pinn_forward.1} parent=39 // pred_region
          %s236 = smul.u32 4, %s18
          %s237 = ssub.s32 5, %s236
          %p238 = scmp.lt.s32.totalorder %s237, 4
          %s239 = scalar_select %p238, %s237, 4
          %s240 = smul.u32 32, %s239
          %p241 = scmp.lt.s32.totalorder %s236, 4
          %s242 = scalar_select %p241, %s236, 4
          %s243 = smul.addr %s242, 2
          %s244 = scalar_lea.vmem %s0, %s243
          %s245 = smul.u32 4, %s18
          %s246 = ssub.s32 5, %s245
          %p247 = scmp.lt.s32.totalorder %s246, 4
          %s248 = scalar_select %p247, %s246, 4
          %s249 = smul.u32 32, %s248
        $region44: #{pinn_forward.1} parent=39 // pred_fallthru
          _
      $region40: #{pinn_forward.1} parent=5 // pred_fallthru
        _
      %p250 = scmp.le.s32.totalorder 1, %s18
      %p251 = scmp.lt.s32.totalorder %s18, 3
      %p252 = pnand %p250, %p251
      %p253 = pneg %p252
      // Predicated region
      $region45: #{pinn_forward.1} parent=5 // pred_check
        _
      $region46: #{pinn_forward.1} parent=5 // pred_check_branch
        %255 = sbr.rel (%p252) target = $region48
      $region47: #{pinn_forward.1} parent=5 // pred_region
        %s256 = ssub.s32 %s18, 1
        %s257 = smul.u32 4, %s23
        %s258 = ssub.s32 5, %s257
        %p259 = scmp.lt.s32.totalorder %s258, 4
        %s260 = scalar_select %p259, %s258, 4
        %s261 = smul.u32 32, %s260
        %p262 = scmp.lt.s32.totalorder %s257, 4
        %s263 = scalar_select %p262, %s257, 4
        %s264 = smul.addr %s263, 2
        %s265 = scalar_lea.vmem %s0, %s264
        %p266 = pneg %p44
        %p267 = pneg %p41
        %p268 = pneg %p65
        %p269 = pneg %p62
        %p270 = pneg %p86
        %p271 = pneg %p83
        %p272 = pneg %p107
        %p273 = pneg %p104
        %p274 = pneg %p128
        %p275 = pneg %p125
        %p276 = pneg %p149
        %p277 = pneg %p146
        %p278 = pneg %p170
        %p279 = pneg %p167
        %p280 = pneg %p196
        %p281 = pneg %p193
        %s282 = sand.u32 %s183, 1
        %s283 = scalar_lea.sflag [#allocation4], %s282
        %s284 = sand.u32 %s183, 1
        %s285 = smul.addr %s284, 4
        %s286 = scalar_lea.vmem [#allocation3], %s285
        %s287 = smul.u32 4, %s23
        %s288 = ssub.s32 5, %s287
        %p289 = scmp.lt.s32.totalorder %s288, 4
        %s290 = scalar_select %p289, %s288, 4
        %s291 = smul.u32 32, %s290
        %p292 = scmp.lt.s32.totalorder %s287, 4
        %s293 = scalar_select %p292, %s287, 4
        %s294 = smul.addr %s293, 2
        %s295 = scalar_lea.vmem %s0, %s294
        %s296 = smul.u32 4, %s23
        %s297 = ssub.s32 5, %s296
        %p298 = scmp.lt.s32.totalorder %s297, 4
        %s299 = scalar_select %p298, %s297, 4
        %s300 = smul.u32 32, %s299
        %s301 = smul.u32 4, %s23
        %s302 = ssub.s32 5, %s301
        %p303 = scmp.lt.s32.totalorder %s302, 4
        %s304 = scalar_select %p303, %s302, 4
        %s305 = smul.u32 16, %s304
        %v306 = vld [vmem:[%s295] sm:$0xff]
        %v307 = vld [vmem:[%s3] sm:$0xff]
        %v308 = vld [vmem:[%s3 + $0x8] sm:$0xff]
        %v309 = vld [vmem:[%s3 + $0x10] sm:$0xff]
        %v310 = vld [vmem:[%s3 + $0x18] sm:$0xff]
        %v311 = vld [vmem:[%s3 + $0x20] sm:$0xff]
        %v312 = vld [vmem:[%s3 + $0x28] sm:$0xff]
        %v313 = vld [vmem:[%s3 + $0x30] sm:$0xff]
        %v314 = vld [vmem:[%s3 + $0x38] sm:$0xff]
        %v315 = vld [vmem:[%s3 + $0x40] sm:$0xff]
        %v316 = vld [vmem:[%s3 + $0x48] sm:$0xff]
        %v317 = vld [vmem:[%s3 + $0x50] sm:$0xff]
        %v318 = vld [vmem:[%s3 + $0x58] sm:$0xff]
        %v319 = vld [vmem:[%s4] sm:$0xff]
        %v320 = vld [vmem:[%s4 + $0x8] sm:$0xff]
        %v321 = vld [vmem:[%s4 + $0x10] sm:$0xff]
        %v322 = vld [vmem:[%s4 + $0x18] sm:$0xff]
        %v323 = vld [vmem:[%s4 + $0x20] sm:$0xff]
        %v324 = vld [vmem:[%s4 + $0x28] sm:$0xff]
        %v325 = vld [vmem:[%s4 + $0x30] sm:$0xff]
        %v326 = vld [vmem:[%s4 + $0x38] sm:$0xff]
        %v327 = vld [vmem:[%s4 + $0x40] sm:$0xff]
        %v328 = vld [vmem:[%s4 + $0x48] sm:$0xff]
        %v329 = vld [vmem:[%s4 + $0x50] sm:$0xff]
        %v330 = vld [vmem:[%s4 + $0x58] sm:$0xff]
        %v331 = vld [vmem:[%s1] sm:$0xff]
        %v332 = vld [vmem:[%s1 + $0x8] sm:$0xff]
        %v333 = vld [vmem:[%s1 + $0x10] sm:$0xff]
        %v334 = vld [vmem:[%s1 + $0x18] sm:$0xff]
        %v335 = vld [vmem:[%s2] sm:$0xff]
        %v336 = vld [vmem:[%s2 + $0x8] sm:$0xff]
        %v337 = vld [vmem:[%s2 + $0x10] sm:$0xff]
        %v338 = vld [vmem:[%s2 + $0x18] sm:$0xff]
        %340 = vset.pattern.permute.xlu0 0
        %341 = vperm.xlu0 %340, %v335
        %v342 = vpop.permute.xlu0 %341
        %345 = vset.pattern.permute.xlu0 0
        %346 = vperm.xlu0 %345, %v336
        %v347 = vpop.permute.xlu0 %346
        %350 = vset.pattern.permute.xlu0 0
        %351 = vperm.xlu0 %350, %v337
        %v352 = vpop.permute.xlu0 %351
        %355 = vset.pattern.permute.xlu0 0
        %356 = vperm.xlu0 %355, %v338
        %v357 = vpop.permute.xlu0 %356
        %v360 = vcombine.high %v306, %v306
        %v362 = vunpack.c.l.s4 1983009808
        %v363 = vunpack.c.0.s8 %v362
        %v364 = vlaneseq
        %v365 = vshrl.u32 %v364, 7
        %v366 = vsub.s32 %v363, %v365
        %v367 = vrot.slane %v306, %v366
        %v369 = vunpack.c.l.s4 1983009808
        %v370 = vunpack.c.0.s8 %v369
        %v371 = vlaneseq
        %v372 = vshrl.u32 %v371, 7
        %v373 = vsub.s32 %v370, %v372
        %v374 = vrot.slane %v360, %v373
        %v375 = vcombine.high %v367, %v367
        %v376 = vcombine.high %v374, %v374
        %vm377 = vcmask 15360
        %v379 = vsel %vm377, %v331, 0
        %v382 = vsel %vm377, %v332, 0
        %v385 = vsel %vm377, %v333, 0
        %v388 = vsel %vm377, %v334, 0
        %vm390 = vcmask 1041408
        %v391 = vsel %vm390, %v367, 0
        %v393 = vsel %vm390, %v375, 0
        %v395 = vsel %vm390, %v374, 0
        %v397 = vsel %vm390, %v376, 0
        %399 = vmatprep.subr.mxu0 0.0
        %400 = vmatpush1.msra.mxu0 0.0
        %401 = vmatprep.subr.mxu0 0.0
        %402 = vmatpush1.msra.mxu0 0.0
        %403 = vmatprep.subr.mxu0 0.0
        %404 = vmatpush1.msra.mxu0 0.0
        %405 = vmatprep.subr.mxu0 0.0
        %406 = vmatpush1.msra.mxu0 0.0
        %407 = vmatprep.subr.mxu0 0.0
        %408 = vmatpush1.msra.mxu0 0.0
        %409 = vmatprep.subr.mxu0 0.0
        %410 = vmatpush1.msra.mxu0 0.0
        %411 = vmatprep.subr.mxu0 0.0
        %412 = vmatpush1.msra.mxu0 0.0
        %413 = vmatprep.subr.mxu0 0.0
        %414 = vmatpush1.msra.mxu0 0.0
        %415 = vmatprep.subr.mxu0 0.0
        %416 = vmatpush1.msra.mxu0 0.0
        %417 = vmatprep.subr.mxu0 0.0
        %418 = vmatpush1.msra.mxu0 0.0
        %419 = vmatprep.subr.mxu0 0.0
        %420 = vmatpush1.msra.mxu0 0.0
        %421 = vmatprep.subr.mxu0 0.0
        %422 = vmatpush1.msra.mxu0 0.0
        %423 = vmatprep.subr.mxu0 0.0
        %424 = vmatpush1.msra.mxu0 0.0
        %425 = vmatprep.subr.mxu0 0.0
        %426 = vmatpush1.msra.mxu0 0.0
        %427 = vmatprep.subr.mxu0 0.0
        %428 = vmatpush1.msra.mxu0 0.0
        %429 = vmatprep.subr.mxu0 %v393
        %430 = vmatpush1.msra.mxu0 %v391
        %431 = vmatprep.subr.mxu0 0.0
        %432 = vmatpush2.msra.mxu0 0.0
        %433 = vmatprep.subr.mxu0 0.0
        %434 = vmatpush2.msra.mxu0 0.0
        %435 = vmatprep.subr.mxu0 0.0
        %436 = vmatpush2.msra.mxu0 0.0
        %437 = vmatprep.subr.mxu0 0.0
        %438 = vmatpush2.msra.mxu0 0.0
        %439 = vmatprep.subr.mxu0 0.0
        %440 = vmatpush2.msra.mxu0 0.0
        %441 = vmatprep.subr.mxu0 0.0
        %442 = vmatpush2.msra.mxu0 0.0
        %443 = vmatprep.subr.mxu0 0.0
        %444 = vmatpush2.msra.mxu0 0.0
        %445 = vmatprep.subr.mxu0 0.0
        %446 = vmatpush2.msra.mxu0 0.0
        %447 = vmatprep.subr.mxu0 0.0
        %448 = vmatpush2.msra.mxu0 0.0
        %449 = vmatprep.subr.mxu0 0.0
        %450 = vmatpush2.msra.mxu0 0.0
        %451 = vmatprep.subr.mxu0 0.0
        %452 = vmatpush2.msra.mxu0 0.0
        %453 = vmatprep.subr.mxu0 0.0
        %454 = vmatpush2.msra.mxu0 0.0
        %455 = vmatprep.subr.mxu0 0.0
        %456 = vmatpush2.msra.mxu0 0.0
        %457 = vmatprep.subr.mxu0 0.0
        %458 = vmatpush2.msra.mxu0 0.0
        %459 = vmatprep.subr.mxu0 0.0
        %460 = vmatpush2.msra.mxu0 0.0
        %461 = vmatprep.subr.mxu0 0.0
        %462 = vmatpush2.msra.mxu0 0.0
        %463 = vmatprep.mubr.f32.mxu0 0.0
        %464 = vmatmul.mubr.f32.gmra.mxu0 %v379
        %v465 = vpop.f32.mrf.mxu0
        %v466 = vadd.f32 %v342, %v465
        %v467 = vpop.f32.mrf.mxu0
        %v468 = vadd.f32 %v342, %v467
        %469 = vmatprep.mubr.f32.mxu0 0.0
        %470 = vmatmul.mubr.f32.gmra.mxu0 %v382
        %v471 = vpop.f32.mrf.mxu0
        %v472 = vadd.f32 %v347, %v471
        %v473 = vpop.f32.mrf.mxu0
        %v474 = vadd.f32 %v347, %v473
        %475 = vmatprep.mubr.f32.mxu0 0.0
        %476 = vmatmul.mubr.f32.gmra.mxu0 %v385
        %v477 = vpop.f32.mrf.mxu0
        %v478 = vadd.f32 %v352, %v477
        %v479 = vpop.f32.mrf.mxu0
        %v480 = vadd.f32 %v352, %v479
        %481 = vmatprep.mubr.f32.mxu0 0.0
        %482 = vmatmul.mubr.f32.gmra.mxu0 %v388
        %v483 = vpop.f32.mrf.mxu0
        %v484 = vadd.f32 %v357, %v483
        %v485 = vpop.f32.mrf.mxu0
        %v486 = vadd.f32 %v357, %v485
        %487 = vdwg.mxu0
        %488 = vmatprep.subr.mxu0 0.0
        %489 = vmatpush1.msra.mxu0 0.0
        %490 = vmatprep.subr.mxu0 0.0
        %491 = vmatpush1.msra.mxu0 0.0
        %492 = vmatprep.subr.mxu0 0.0
        %493 = vmatpush1.msra.mxu0 0.0
        %494 = vmatprep.subr.mxu0 0.0
        %495 = vmatpush1.msra.mxu0 0.0
        %496 = vmatprep.subr.mxu0 0.0
        %497 = vmatpush1.msra.mxu0 0.0
        %498 = vmatprep.subr.mxu0 0.0
        %499 = vmatpush1.msra.mxu0 0.0
        %500 = vmatprep.subr.mxu0 0.0
        %501 = vmatpush1.msra.mxu0 0.0
        %502 = vmatprep.subr.mxu0 0.0
        %503 = vmatpush1.msra.mxu0 0.0
        %504 = vmatprep.subr.mxu0 0.0
        %505 = vmatpush1.msra.mxu0 0.0
        %506 = vmatprep.subr.mxu0 0.0
        %507 = vmatpush1.msra.mxu0 0.0
        %508 = vmatprep.subr.mxu0 0.0
        %509 = vmatpush1.msra.mxu0 0.0
        %510 = vmatprep.subr.mxu0 0.0
        %511 = vmatpush1.msra.mxu0 0.0
        %512 = vmatprep.subr.mxu0 0.0
        %513 = vmatpush1.msra.mxu0 0.0
        %514 = vmatprep.subr.mxu0 0.0
        %515 = vmatpush1.msra.mxu0 0.0
        %516 = vmatprep.subr.mxu0 0.0
        %517 = vmatpush1.msra.mxu0 0.0
        %518 = vmatprep.subr.mxu0 %v397
        %519 = vmatpush1.msra.mxu0 %v395
        %520 = vmatprep.subr.mxu0 0.0
        %521 = vmatpush2.msra.mxu0 0.0
        %522 = vmatprep.subr.mxu0 0.0
        %523 = vmatpush2.msra.mxu0 0.0
        %524 = vmatprep.subr.mxu0 0.0
        %525 = vmatpush2.msra.mxu0 0.0
        %526 = vmatprep.subr.mxu0 0.0
        %527 = vmatpush2.msra.mxu0 0.0
        %528 = vmatprep.subr.mxu0 0.0
        %529 = vmatpush2.msra.mxu0 0.0
        %530 = vmatprep.subr.mxu0 0.0
        %531 = vmatpush2.msra.mxu0 0.0
        %532 = vmatprep.subr.mxu0 0.0
        %533 = vmatpush2.msra.mxu0 0.0
        %534 = vmatprep.subr.mxu0 0.0
        %535 = vmatpush2.msra.mxu0 0.0
        %536 = vmatprep.subr.mxu0 0.0
        %537 = vmatpush2.msra.mxu0 0.0
        %538 = vmatprep.subr.mxu0 0.0
        %539 = vmatpush2.msra.mxu0 0.0
        %540 = vmatprep.subr.mxu0 0.0
        %541 = vmatpush2.msra.mxu0 0.0
        %542 = vmatprep.subr.mxu0 0.0
        %543 = vmatpush2.msra.mxu0 0.0
        %544 = vmatprep.subr.mxu0 0.0
        %545 = vmatpush2.msra.mxu0 0.0
        %546 = vmatprep.subr.mxu0 0.0
        %547 = vmatpush2.msra.mxu0 0.0
        %548 = vmatprep.subr.mxu0 0.0
        %549 = vmatpush2.msra.mxu0 0.0
        %550 = vmatprep.subr.mxu0 0.0
        %551 = vmatpush2.msra.mxu0 0.0
        %552 = vmatprep.mubr.f32.mxu0 0.0
        %553 = vmatmul.mubr.f32.gmra.mxu0 %v379
        %v554 = vpop.f32.mrf.mxu0
        %v555 = vadd.f32 %v342, %v554
        %v556 = vpop.f32.mrf.mxu0
        %v557 = vadd.f32 %v342, %v556
        %558 = vmatprep.mubr.f32.mxu0 0.0
        %559 = vmatmul.mubr.f32.gmra.mxu0 %v382
        %v560 = vpop.f32.mrf.mxu0
        %v561 = vadd.f32 %v347, %v560
        %v562 = vpop.f32.mrf.mxu0
        %v563 = vadd.f32 %v347, %v562
        %564 = vmatprep.mubr.f32.mxu0 0.0
        %565 = vmatmul.mubr.f32.gmra.mxu0 %v385
        %v566 = vpop.f32.mrf.mxu0
        %v567 = vadd.f32 %v352, %v566
        %v568 = vpop.f32.mrf.mxu0
        %v569 = vadd.f32 %v352, %v568
        %570 = vmatprep.mubr.f32.mxu0 0.0
        %571 = vmatmul.mubr.f32.gmra.mxu0 %v388
        %v572 = vpop.f32.mrf.mxu0
        %v573 = vadd.f32 %v357, %v572
        %v574 = vpop.f32.mrf.mxu0
        %v575 = vadd.f32 %v357, %v574
        %576 = vdwg.mxu0
        %v577 = vtanh.pop %v466
        %v578 = vtanh.pop %v468
        %v579 = vtanh.pop %v555
        %v580 = vtanh.pop %v557
        %v581 = vtanh.pop %v472
        %v582 = vtanh.pop %v474
        %v583 = vtanh.pop %v561
        %v584 = vtanh.pop %v563
        %v585 = vtanh.pop %v478
        %v586 = vtanh.pop %v480
        %v587 = vtanh.pop %v567
        %v588 = vtanh.pop %v569
        %v589 = vtanh.pop %v484
        %v590 = vtanh.pop %v486
        %v591 = vtanh.pop %v573
        %v592 = vtanh.pop %v575
        %594 = vset.pattern.permute.xlu0 0
        %595 = vperm.xlu0 %594, %v319
        %v596 = vpop.permute.xlu0 %595
        %599 = vset.pattern.permute.xlu0 0
        %600 = vperm.xlu0 %599, %v320
        %v601 = vpop.permute.xlu0 %600
        %604 = vset.pattern.permute.xlu0 0
        %605 = vperm.xlu0 %604, %v321
        %v606 = vpop.permute.xlu0 %605
        %609 = vset.pattern.permute.xlu0 0
        %610 = vperm.xlu0 %609, %v322
        %v611 = vpop.permute.xlu0 %610
        %vm613 = vcmask 261120
        %v615 = vsel %vm613, %v307, 0
        %v618 = vsel %vm613, %v308, 0
        %v621 = vsel %vm613, %v309, 0
        %v624 = vsel %vm613, %v310, 0
        %626 = vmatprep.subr.mxu0 0.0
        %627 = vmatpush1.msra.mxu0 0.0
        %628 = vmatprep.subr.mxu0 0.0
        %629 = vmatpush1.msra.mxu0 0.0
        %630 = vmatprep.subr.mxu0 0.0
        %631 = vmatpush1.msra.mxu0 0.0
        %632 = vmatprep.subr.mxu0 0.0
        %633 = vmatpush1.msra.mxu0 0.0
        %634 = vmatprep.subr.mxu0 0.0
        %635 = vmatpush1.msra.mxu0 0.0
        %636 = vmatprep.subr.mxu0 0.0
        %637 = vmatpush1.msra.mxu0 0.0
        %638 = vmatprep.subr.mxu0 0.0
        %639 = vmatpush1.msra.mxu0 0.0
        %640 = vmatprep.subr.mxu0 0.0
        %641 = vmatpush1.msra.mxu0 0.0
        %642 = vmatprep.subr.mxu0 0.0
        %643 = vmatpush1.msra.mxu0 0.0
        %644 = vmatprep.subr.mxu0 0.0
        %645 = vmatpush1.msra.mxu0 0.0
        %646 = vmatprep.subr.mxu0 0.0
        %647 = vmatpush1.msra.mxu0 0.0
        %648 = vmatprep.subr.mxu0 0.0
        %649 = vmatpush1.msra.mxu0 0.0
        %650 = vmatprep.subr.mxu0 %v590
        %651 = vmatpush1.msra.mxu0 %v589
        %652 = vmatprep.subr.mxu0 %v586
        %653 = vmatpush1.msra.mxu0 %v585
        %654 = vmatprep.subr.mxu0 %v582
        %655 = vmatpush1.msra.mxu0 %v581
        %656 = vmatprep.subr.mxu0 %v578
        %657 = vmatpush1.msra.mxu0 %v577
        %658 = vmatprep.subr.mxu0 0.0
        %659 = vmatpush2.msra.mxu0 0.0
        %660 = vmatprep.subr.mxu0 0.0
        %661 = vmatpush2.msra.mxu0 0.0
        %662 = vmatprep.subr.mxu0 0.0
        %663 = vmatpush2.msra.mxu0 0.0
        %664 = vmatprep.subr.mxu0 0.0
        %665 = vmatpush2.msra.mxu0 0.0
        %666 = vmatprep.subr.mxu0 0.0
        %667 = vmatpush2.msra.mxu0 0.0
        %668 = vmatprep.subr.mxu0 0.0
        %669 = vmatpush2.msra.mxu0 0.0
        %670 = vmatprep.subr.mxu0 0.0
        %671 = vmatpush2.msra.mxu0 0.0
        %672 = vmatprep.subr.mxu0 0.0
        %673 = vmatpush2.msra.mxu0 0.0
        %674 = vmatprep.subr.mxu0 0.0
        %675 = vmatpush2.msra.mxu0 0.0
        %676 = vmatprep.subr.mxu0 0.0
        %677 = vmatpush2.msra.mxu0 0.0
        %678 = vmatprep.subr.mxu0 0.0
        %679 = vmatpush2.msra.mxu0 0.0
        %680 = vmatprep.subr.mxu0 0.0
        %681 = vmatpush2.msra.mxu0 0.0
        %682 = vmatprep.subr.mxu0 0.0
        %683 = vmatpush2.msra.mxu0 0.0
        %684 = vmatprep.subr.mxu0 0.0
        %685 = vmatpush2.msra.mxu0 0.0
        %686 = vmatprep.subr.mxu0 0.0
        %687 = vmatpush2.msra.mxu0 0.0
        %688 = vmatprep.subr.mxu0 0.0
        %689 = vmatpush2.msra.mxu0 0.0
        %690 = vmatprep.mubr.f32.mxu0 0.0
        %691 = vmatmul.mubr.f32.gmra.mxu0 %v615
        %v692 = vpop.f32.mrf.mxu0
        %v693 = vadd.f32 %v596, %v692
        %v694 = vpop.f32.mrf.mxu0
        %v695 = vadd.f32 %v596, %v694
        %696 = vmatprep.mubr.f32.mxu0 0.0
        %697 = vmatmul.mubr.f32.gmra.mxu0 %v618
        %v698 = vpop.f32.mrf.mxu0
        %v699 = vadd.f32 %v601, %v698
        %v700 = vpop.f32.mrf.mxu0
        %v701 = vadd.f32 %v601, %v700
        %702 = vmatprep.mubr.f32.mxu0 0.0
        %703 = vmatmul.mubr.f32.gmra.mxu0 %v621
        %v704 = vpop.f32.mrf.mxu0
        %v705 = vadd.f32 %v606, %v704
        %v706 = vpop.f32.mrf.mxu0
        %v707 = vadd.f32 %v606, %v706
        %708 = vmatprep.mubr.f32.mxu0 0.0
        %709 = vmatmul.mubr.f32.gmra.mxu0 %v624
        %v710 = vpop.f32.mrf.mxu0
        %v711 = vadd.f32 %v611, %v710
        %v712 = vpop.f32.mrf.mxu0
        %v713 = vadd.f32 %v611, %v712
        %714 = vdwg.mxu0
        %715 = vmatprep.subr.mxu0 0.0
        %716 = vmatpush1.msra.mxu0 0.0
        %717 = vmatprep.subr.mxu0 0.0
        %718 = vmatpush1.msra.mxu0 0.0
        %719 = vmatprep.subr.mxu0 0.0
        %720 = vmatpush1.msra.mxu0 0.0
        %721 = vmatprep.subr.mxu0 0.0
        %722 = vmatpush1.msra.mxu0 0.0
        %723 = vmatprep.subr.mxu0 0.0
        %724 = vmatpush1.msra.mxu0 0.0
        %725 = vmatprep.subr.mxu0 0.0
        %726 = vmatpush1.msra.mxu0 0.0
        %727 = vmatprep.subr.mxu0 0.0
        %728 = vmatpush1.msra.mxu0 0.0
        %729 = vmatprep.subr.mxu0 0.0
        %730 = vmatpush1.msra.mxu0 0.0
        %731 = vmatprep.subr.mxu0 0.0
        %732 = vmatpush1.msra.mxu0 0.0
        %733 = vmatprep.subr.mxu0 0.0
        %734 = vmatpush1.msra.mxu0 0.0
        %735 = vmatprep.subr.mxu0 0.0
        %736 = vmatpush1.msra.mxu0 0.0
        %737 = vmatprep.subr.mxu0 0.0
        %738 = vmatpush1.msra.mxu0 0.0
        %739 = vmatprep.subr.mxu0 %v592
        %740 = vmatpush1.msra.mxu0 %v591
        %741 = vmatprep.subr.mxu0 %v588
        %742 = vmatpush1.msra.mxu0 %v587
        %743 = vmatprep.subr.mxu0 %v584
        %744 = vmatpush1.msra.mxu0 %v583
        %745 = vmatprep.subr.mxu0 %v580
        %746 = vmatpush1.msra.mxu0 %v579
        %747 = vmatprep.subr.mxu0 0.0
        %748 = vmatpush2.msra.mxu0 0.0
        %749 = vmatprep.subr.mxu0 0.0
        %750 = vmatpush2.msra.mxu0 0.0
        %751 = vmatprep.subr.mxu0 0.0
        %752 = vmatpush2.msra.mxu0 0.0
        %753 = vmatprep.subr.mxu0 0.0
        %754 = vmatpush2.msra.mxu0 0.0
        %755 = vmatprep.subr.mxu0 0.0
        %756 = vmatpush2.msra.mxu0 0.0
        %757 = vmatprep.subr.mxu0 0.0
        %758 = vmatpush2.msra.mxu0 0.0
        %759 = vmatprep.subr.mxu0 0.0
        %760 = vmatpush2.msra.mxu0 0.0
        %761 = vmatprep.subr.mxu0 0.0
        %762 = vmatpush2.msra.mxu0 0.0
        %763 = vmatprep.subr.mxu0 0.0
        %764 = vmatpush2.msra.mxu0 0.0
        %765 = vmatprep.subr.mxu0 0.0
        %766 = vmatpush2.msra.mxu0 0.0
        %767 = vmatprep.subr.mxu0 0.0
        %768 = vmatpush2.msra.mxu0 0.0
        %769 = vmatprep.subr.mxu0 0.0
        %770 = vmatpush2.msra.mxu0 0.0
        %771 = vmatprep.subr.mxu0 0.0
        %772 = vmatpush2.msra.mxu0 0.0
        %773 = vmatprep.subr.mxu0 0.0
        %774 = vmatpush2.msra.mxu0 0.0
        %775 = vmatprep.subr.mxu0 0.0
        %776 = vmatpush2.msra.mxu0 0.0
        %777 = vmatprep.subr.mxu0 0.0
        %778 = vmatpush2.msra.mxu0 0.0
        %779 = vmatprep.mubr.f32.mxu0 0.0
        %780 = vmatmul.mubr.f32.gmra.mxu0 %v615
        %v781 = vpop.f32.mrf.mxu0
        %v782 = vadd.f32 %v596, %v781
        %v783 = vpop.f32.mrf.mxu0
        %v784 = vadd.f32 %v596, %v783
        %785 = vmatprep.mubr.f32.mxu0 0.0
        %786 = vmatmul.mubr.f32.gmra.mxu0 %v618
        %v787 = vpop.f32.mrf.mxu0
        %v788 = vadd.f32 %v601, %v787
        %v789 = vpop.f32.mrf.mxu0
        %v790 = vadd.f32 %v601, %v789
        %791 = vmatprep.mubr.f32.mxu0 0.0
        %792 = vmatmul.mubr.f32.gmra.mxu0 %v621
        %v793 = vpop.f32.mrf.mxu0
        %v794 = vadd.f32 %v606, %v793
        %v795 = vpop.f32.mrf.mxu0
        %v796 = vadd.f32 %v606, %v795
        %797 = vmatprep.mubr.f32.mxu0 0.0
        %798 = vmatmul.mubr.f32.gmra.mxu0 %v624
        %v799 = vpop.f32.mrf.mxu0
        %v800 = vadd.f32 %v611, %v799
        %v801 = vpop.f32.mrf.mxu0
        %v802 = vadd.f32 %v611, %v801
        %803 = vdwg.mxu0
        %v804 = vtanh.pop %v693
        %v805 = vtanh.pop %v695
        %v806 = vtanh.pop %v782
        %v807 = vtanh.pop %v784
        %v808 = vtanh.pop %v699
        %v809 = vtanh.pop %v701
        %v810 = vtanh.pop %v788
        %v811 = vtanh.pop %v790
        %v812 = vtanh.pop %v705
        %v813 = vtanh.pop %v707
        %v814 = vtanh.pop %v794
        %v815 = vtanh.pop %v796
        %v816 = vtanh.pop %v711
        %v817 = vtanh.pop %v713
        %v818 = vtanh.pop %v800
        %v819 = vtanh.pop %v802
        %821 = vset.pattern.permute.xlu0 0
        %822 = vperm.xlu0 %821, %v323
        %v823 = vpop.permute.xlu0 %822
        %826 = vset.pattern.permute.xlu0 0
        %827 = vperm.xlu0 %826, %v324
        %v828 = vpop.permute.xlu0 %827
        %831 = vset.pattern.permute.xlu0 0
        %832 = vperm.xlu0 %831, %v325
        %v833 = vpop.permute.xlu0 %832
        %836 = vset.pattern.permute.xlu0 0
        %837 = vperm.xlu0 %836, %v326
        %v838 = vpop.permute.xlu0 %837
        %v841 = vsel %vm613, %v311, 0
        %v844 = vsel %vm613, %v312, 0
        %v847 = vsel %vm613, %v313, 0
        %v850 = vsel %vm613, %v314, 0
        %852 = vmatprep.subr.mxu0 0.0
        %853 = vmatpush1.msra.mxu0 0.0
        %854 = vmatprep.subr.mxu0 0.0
        %855 = vmatpush1.msra.mxu0 0.0
        %856 = vmatprep.subr.mxu0 0.0
        %857 = vmatpush1.msra.mxu0 0.0
        %858 = vmatprep.subr.mxu0 0.0
        %859 = vmatpush1.msra.mxu0 0.0
        %860 = vmatprep.subr.mxu0 0.0
        %861 = vmatpush1.msra.mxu0 0.0
        %862 = vmatprep.subr.mxu0 0.0
        %863 = vmatpush1.msra.mxu0 0.0
        %864 = vmatprep.subr.mxu0 0.0
        %865 = vmatpush1.msra.mxu0 0.0
        %866 = vmatprep.subr.mxu0 0.0
        %867 = vmatpush1.msra.mxu0 0.0
        %868 = vmatprep.subr.mxu0 0.0
        %869 = vmatpush1.msra.mxu0 0.0
        %870 = vmatprep.subr.mxu0 0.0
        %871 = vmatpush1.msra.mxu0 0.0
        %872 = vmatprep.subr.mxu0 0.0
        %873 = vmatpush1.msra.mxu0 0.0
        %874 = vmatprep.subr.mxu0 0.0
        %875 = vmatpush1.msra.mxu0 0.0
        %876 = vmatprep.subr.mxu0 %v817
        %877 = vmatpush1.msra.mxu0 %v816
        %878 = vmatprep.subr.mxu0 %v813
        %879 = vmatpush1.msra.mxu0 %v812
        %880 = vmatprep.subr.mxu0 %v809
        %881 = vmatpush1.msra.mxu0 %v808
        %882 = vmatprep.subr.mxu0 %v805
        %883 = vmatpush1.msra.mxu0 %v804
        %884 = vmatprep.subr.mxu0 0.0
        %885 = vmatpush2.msra.mxu0 0.0
        %886 = vmatprep.subr.mxu0 0.0
        %887 = vmatpush2.msra.mxu0 0.0
        %888 = vmatprep.subr.mxu0 0.0
        %889 = vmatpush2.msra.mxu0 0.0
        %890 = vmatprep.subr.mxu0 0.0
        %891 = vmatpush2.msra.mxu0 0.0
        %892 = vmatprep.subr.mxu0 0.0
        %893 = vmatpush2.msra.mxu0 0.0
        %894 = vmatprep.subr.mxu0 0.0
        %895 = vmatpush2.msra.mxu0 0.0
        %896 = vmatprep.subr.mxu0 0.0
        %897 = vmatpush2.msra.mxu0 0.0
        %898 = vmatprep.subr.mxu0 0.0
        %899 = vmatpush2.msra.mxu0 0.0
        %900 = vmatprep.subr.mxu0 0.0
        %901 = vmatpush2.msra.mxu0 0.0
        %902 = vmatprep.subr.mxu0 0.0
        %903 = vmatpush2.msra.mxu0 0.0
        %904 = vmatprep.subr.mxu0 0.0
        %905 = vmatpush2.msra.mxu0 0.0
        %906 = vmatprep.subr.mxu0 0.0
        %907 = vmatpush2.msra.mxu0 0.0
        %908 = vmatprep.subr.mxu0 0.0
        %909 = vmatpush2.msra.mxu0 0.0
        %910 = vmatprep.subr.mxu0 0.0
        %911 = vmatpush2.msra.mxu0 0.0
        %912 = vmatprep.subr.mxu0 0.0
        %913 = vmatpush2.msra.mxu0 0.0
        %914 = vmatprep.subr.mxu0 0.0
        %915 = vmatpush2.msra.mxu0 0.0
        %916 = vmatprep.mubr.f32.mxu0 0.0
        %917 = vmatmul.mubr.f32.gmra.mxu0 %v841
        %v918 = vpop.f32.mrf.mxu0
        %v919 = vadd.f32 %v823, %v918
        %v920 = vpop.f32.mrf.mxu0
        %v921 = vadd.f32 %v823, %v920
        %922 = vmatprep.mubr.f32.mxu0 0.0
        %923 = vmatmul.mubr.f32.gmra.mxu0 %v844
        %v924 = vpop.f32.mrf.mxu0
        %v925 = vadd.f32 %v828, %v924
        %v926 = vpop.f32.mrf.mxu0
        %v927 = vadd.f32 %v828, %v926
        %928 = vmatprep.mubr.f32.mxu0 0.0
        %929 = vmatmul.mubr.f32.gmra.mxu0 %v847
        %v930 = vpop.f32.mrf.mxu0
        %v931 = vadd.f32 %v833, %v930
        %v932 = vpop.f32.mrf.mxu0
        %v933 = vadd.f32 %v833, %v932
        %934 = vmatprep.mubr.f32.mxu0 0.0
        %935 = vmatmul.mubr.f32.gmra.mxu0 %v850
        %v936 = vpop.f32.mrf.mxu0
        %v937 = vadd.f32 %v838, %v936
        %v938 = vpop.f32.mrf.mxu0
        %v939 = vadd.f32 %v838, %v938
        %940 = vdwg.mxu0
        %941 = vmatprep.subr.mxu0 0.0
        %942 = vmatpush1.msra.mxu0 0.0
        %943 = vmatprep.subr.mxu0 0.0
        %944 = vmatpush1.msra.mxu0 0.0
        %945 = vmatprep.subr.mxu0 0.0
        %946 = vmatpush1.msra.mxu0 0.0
        %947 = vmatprep.subr.mxu0 0.0
        %948 = vmatpush1.msra.mxu0 0.0
        %949 = vmatprep.subr.mxu0 0.0
        %950 = vmatpush1.msra.mxu0 0.0
        %951 = vmatprep.subr.mxu0 0.0
        %952 = vmatpush1.msra.mxu0 0.0
        %953 = vmatprep.subr.mxu0 0.0
        %954 = vmatpush1.msra.mxu0 0.0
        %955 = vmatprep.subr.mxu0 0.0
        %956 = vmatpush1.msra.mxu0 0.0
        %957 = vmatprep.subr.mxu0 0.0
        %958 = vmatpush1.msra.mxu0 0.0
        %959 = vmatprep.subr.mxu0 0.0
        %960 = vmatpush1.msra.mxu0 0.0
        %961 = vmatprep.subr.mxu0 0.0
        %962 = vmatpush1.msra.mxu0 0.0
        %963 = vmatprep.subr.mxu0 0.0
        %964 = vmatpush1.msra.mxu0 0.0
        %965 = vmatprep.subr.mxu0 %v819
        %966 = vmatpush1.msra.mxu0 %v818
        %967 = vmatprep.subr.mxu0 %v815
        %968 = vmatpush1.msra.mxu0 %v814
        %969 = vmatprep.subr.mxu0 %v811
        %970 = vmatpush1.msra.mxu0 %v810
        %971 = vmatprep.subr.mxu0 %v807
        %972 = vmatpush1.msra.mxu0 %v806
        %973 = vmatprep.subr.mxu0 0.0
        %974 = vmatpush2.msra.mxu0 0.0
        %975 = vmatprep.subr.mxu0 0.0
        %976 = vmatpush2.msra.mxu0 0.0
        %977 = vmatprep.subr.mxu0 0.0
        %978 = vmatpush2.msra.mxu0 0.0
        %979 = vmatprep.subr.mxu0 0.0
        %980 = vmatpush2.msra.mxu0 0.0
        %981 = vmatprep.subr.mxu0 0.0
        %982 = vmatpush2.msra.mxu0 0.0
        %983 = vmatprep.subr.mxu0 0.0
        %984 = vmatpush2.msra.mxu0 0.0
        %985 = vmatprep.subr.mxu0 0.0
        %986 = vmatpush2.msra.mxu0 0.0
        %987 = vmatprep.subr.mxu0 0.0
        %988 = vmatpush2.msra.mxu0 0.0
        %989 = vmatprep.subr.mxu0 0.0
        %990 = vmatpush2.msra.mxu0 0.0
        %991 = vmatprep.subr.mxu0 0.0
        %992 = vmatpush2.msra.mxu0 0.0
        %993 = vmatprep.subr.mxu0 0.0
        %994 = vmatpush2.msra.mxu0 0.0
        %995 = vmatprep.subr.mxu0 0.0
        %996 = vmatpush2.msra.mxu0 0.0
        %997 = vmatprep.subr.mxu0 0.0
        %998 = vmatpush2.msra.mxu0 0.0
        %999 = vmatprep.subr.mxu0 0.0
        %1000 = vmatpush2.msra.mxu0 0.0
        %1001 = vmatprep.subr.mxu0 0.0
        %1002 = vmatpush2.msra.mxu0 0.0
        %1003 = vmatprep.subr.mxu0 0.0
        %1004 = vmatpush2.msra.mxu0 0.0
        %1005 = vmatprep.mubr.f32.mxu0 0.0
        %1006 = vmatmul.mubr.f32.gmra.mxu0 %v841
        %v1007 = vpop.f32.mrf.mxu0
        %v1008 = vadd.f32 %v823, %v1007
        %v1009 = vpop.f32.mrf.mxu0
        %v1010 = vadd.f32 %v823, %v1009
        %1011 = vmatprep.mubr.f32.mxu0 0.0
        %1012 = vmatmul.mubr.f32.gmra.mxu0 %v844
        %v1013 = vpop.f32.mrf.mxu0
        %v1014 = vadd.f32 %v828, %v1013
        %v1015 = vpop.f32.mrf.mxu0
        %v1016 = vadd.f32 %v828, %v1015
        %1017 = vmatprep.mubr.f32.mxu0 0.0
        %1018 = vmatmul.mubr.f32.gmra.mxu0 %v847
        %v1019 = vpop.f32.mrf.mxu0
        %v1020 = vadd.f32 %v833, %v1019
        %v1021 = vpop.f32.mrf.mxu0
        %v1022 = vadd.f32 %v833, %v1021
        %1023 = vmatprep.mubr.f32.mxu0 0.0
        %1024 = vmatmul.mubr.f32.gmra.mxu0 %v850
        %v1025 = vpop.f32.mrf.mxu0
        %v1026 = vadd.f32 %v838, %v1025
        %v1027 = vpop.f32.mrf.mxu0
        %v1028 = vadd.f32 %v838, %v1027
        %1029 = vdwg.mxu0
        %v1030 = vtanh.pop %v919
        %v1031 = vtanh.pop %v921
        %v1032 = vtanh.pop %v1008
        %v1033 = vtanh.pop %v1010
        %v1034 = vtanh.pop %v925
        %v1035 = vtanh.pop %v927
        %v1036 = vtanh.pop %v1014
        %v1037 = vtanh.pop %v1016
        %v1038 = vtanh.pop %v931
        %v1039 = vtanh.pop %v933
        %v1040 = vtanh.pop %v1020
        %v1041 = vtanh.pop %v1022
        %v1042 = vtanh.pop %v937
        %v1043 = vtanh.pop %v939
        %v1044 = vtanh.pop %v1026
        %v1045 = vtanh.pop %v1028
        %1047 = vset.pattern.permute.xlu0 0
        %1048 = vperm.xlu0 %1047, %v327
        %v1049 = vpop.permute.xlu0 %1048
        %1052 = vset.pattern.permute.xlu0 0
        %1053 = vperm.xlu0 %1052, %v328
        %v1054 = vpop.permute.xlu0 %1053
        %1057 = vset.pattern.permute.xlu0 0
        %1058 = vperm.xlu0 %1057, %v329
        %v1059 = vpop.permute.xlu0 %1058
        %1062 = vset.pattern.permute.xlu0 0
        %1063 = vperm.xlu0 %1062, %v330
        %v1064 = vpop.permute.xlu0 %1063
        %v1067 = vsel %vm613, %v315, 0
        %v1070 = vsel %vm613, %v316, 0
        %v1073 = vsel %vm613, %v317, 0
        %v1076 = vsel %vm613, %v318, 0
        %1078 = vmatprep.subr.mxu0 0.0
        %1079 = vmatpush1.msra.mxu0 0.0
        %1080 = vmatprep.subr.mxu0 0.0
        %1081 = vmatpush1.msra.mxu0 0.0
        %1082 = vmatprep.subr.mxu0 0.0
        %1083 = vmatpush1.msra.mxu0 0.0
        %1084 = vmatprep.subr.mxu0 0.0
        %1085 = vmatpush1.msra.mxu0 0.0
        %1086 = vmatprep.subr.mxu0 0.0
        %1087 = vmatpush1.msra.mxu0 0.0
        %1088 = vmatprep.subr.mxu0 0.0
        %1089 = vmatpush1.msra.mxu0 0.0
        %1090 = vmatprep.subr.mxu0 0.0
        %1091 = vmatpush1.msra.mxu0 0.0
        %1092 = vmatprep.subr.mxu0 0.0
        %1093 = vmatpush1.msra.mxu0 0.0
        %1094 = vmatprep.subr.mxu0 0.0
        %1095 = vmatpush1.msra.mxu0 0.0
        %1096 = vmatprep.subr.mxu0 0.0
        %1097 = vmatpush1.msra.mxu0 0.0
        %1098 = vmatprep.subr.mxu0 0.0
        %1099 = vmatpush1.msra.mxu0 0.0
        %1100 = vmatprep.subr.mxu0 0.0
        %1101 = vmatpush1.msra.mxu0 0.0
        %1102 = vmatprep.subr.mxu0 %v1043
        %1103 = vmatpush1.msra.mxu0 %v1042
        %1104 = vmatprep.subr.mxu0 %v1039
        %1105 = vmatpush1.msra.mxu0 %v1038
        %1106 = vmatprep.subr.mxu0 %v1035
        %1107 = vmatpush1.msra.mxu0 %v1034
        %1108 = vmatprep.subr.mxu0 %v1031
        %1109 = vmatpush1.msra.mxu0 %v1030
        %1110 = vmatprep.subr.mxu0 0.0
        %1111 = vmatpush2.msra.mxu0 0.0
        %1112 = vmatprep.subr.mxu0 0.0
        %1113 = vmatpush2.msra.mxu0 0.0
        %1114 = vmatprep.subr.mxu0 0.0
        %1115 = vmatpush2.msra.mxu0 0.0
        %1116 = vmatprep.subr.mxu0 0.0
        %1117 = vmatpush2.msra.mxu0 0.0
        %1118 = vmatprep.subr.mxu0 0.0
        %1119 = vmatpush2.msra.mxu0 0.0
        %1120 = vmatprep.subr.mxu0 0.0
        %1121 = vmatpush2.msra.mxu0 0.0
        %1122 = vmatprep.subr.mxu0 0.0
        %1123 = vmatpush2.msra.mxu0 0.0
        %1124 = vmatprep.subr.mxu0 0.0
        %1125 = vmatpush2.msra.mxu0 0.0
        %1126 = vmatprep.subr.mxu0 0.0
        %1127 = vmatpush2.msra.mxu0 0.0
        %1128 = vmatprep.subr.mxu0 0.0
        %1129 = vmatpush2.msra.mxu0 0.0
        %1130 = vmatprep.subr.mxu0 0.0
        %1131 = vmatpush2.msra.mxu0 0.0
        %1132 = vmatprep.subr.mxu0 0.0
        %1133 = vmatpush2.msra.mxu0 0.0
        %1134 = vmatprep.subr.mxu0 0.0
        %1135 = vmatpush2.msra.mxu0 0.0
        %1136 = vmatprep.subr.mxu0 0.0
        %1137 = vmatpush2.msra.mxu0 0.0
        %1138 = vmatprep.subr.mxu0 0.0
        %1139 = vmatpush2.msra.mxu0 0.0
        %1140 = vmatprep.subr.mxu0 0.0
        %1141 = vmatpush2.msra.mxu0 0.0
        %1142 = vmatprep.mubr.f32.mxu0 0.0
        %1143 = vmatmul.mubr.f32.gmra.mxu0 %v1067
        %v1144 = vpop.f32.mrf.mxu0
        %v1145 = vadd.f32 %v1049, %v1144
        %v1146 = vpop.f32.mrf.mxu0
        %v1147 = vadd.f32 %v1049, %v1146
        %1148 = vmatprep.mubr.f32.mxu0 0.0
        %1149 = vmatmul.mubr.f32.gmra.mxu0 %v1070
        %v1150 = vpop.f32.mrf.mxu0
        %v1151 = vadd.f32 %v1054, %v1150
        %v1152 = vpop.f32.mrf.mxu0
        %v1153 = vadd.f32 %v1054, %v1152
        %1154 = vmatprep.mubr.f32.mxu0 0.0
        %1155 = vmatmul.mubr.f32.gmra.mxu0 %v1073
        %v1156 = vpop.f32.mrf.mxu0
        %v1157 = vadd.f32 %v1059, %v1156
        %v1158 = vpop.f32.mrf.mxu0
        %v1159 = vadd.f32 %v1059, %v1158
        %1160 = vmatprep.mubr.f32.mxu0 0.0
        %1161 = vmatmul.mubr.f32.gmra.mxu0 %v1076
        %v1162 = vpop.f32.mrf.mxu0
        %v1163 = vadd.f32 %v1064, %v1162
        %v1164 = vpop.f32.mrf.mxu0
        %v1165 = vadd.f32 %v1064, %v1164
        %1166 = vdwg.mxu0
        %1167 = vmatprep.subr.mxu0 0.0
        %1168 = vmatpush1.msra.mxu0 0.0
        %1169 = vmatprep.subr.mxu0 0.0
        %1170 = vmatpush1.msra.mxu0 0.0
        %1171 = vmatprep.subr.mxu0 0.0
        %1172 = vmatpush1.msra.mxu0 0.0
        %1173 = vmatprep.subr.mxu0 0.0
        %1174 = vmatpush1.msra.mxu0 0.0
        %1175 = vmatprep.subr.mxu0 0.0
        %1176 = vmatpush1.msra.mxu0 0.0
        %1177 = vmatprep.subr.mxu0 0.0
        %1178 = vmatpush1.msra.mxu0 0.0
        %1179 = vmatprep.subr.mxu0 0.0
        %1180 = vmatpush1.msra.mxu0 0.0
        %1181 = vmatprep.subr.mxu0 0.0
        %1182 = vmatpush1.msra.mxu0 0.0
        %1183 = vmatprep.subr.mxu0 0.0
        %1184 = vmatpush1.msra.mxu0 0.0
        %1185 = vmatprep.subr.mxu0 0.0
        %1186 = vmatpush1.msra.mxu0 0.0
        %1187 = vmatprep.subr.mxu0 0.0
        %1188 = vmatpush1.msra.mxu0 0.0
        %1189 = vmatprep.subr.mxu0 0.0
        %1190 = vmatpush1.msra.mxu0 0.0
        %1191 = vmatprep.subr.mxu0 %v1045
        %1192 = vmatpush1.msra.mxu0 %v1044
        %1193 = vmatprep.subr.mxu0 %v1041
        %1194 = vmatpush1.msra.mxu0 %v1040
        %1195 = vmatprep.subr.mxu0 %v1037
        %1196 = vmatpush1.msra.mxu0 %v1036
        %1197 = vmatprep.subr.mxu0 %v1033
        %1198 = vmatpush1.msra.mxu0 %v1032
        %1199 = vmatprep.subr.mxu0 0.0
        %1200 = vmatpush2.msra.mxu0 0.0
        %1201 = vmatprep.subr.mxu0 0.0
        %1202 = vmatpush2.msra.mxu0 0.0
        %1203 = vmatprep.subr.mxu0 0.0
        %1204 = vmatpush2.msra.mxu0 0.0
        %1205 = vmatprep.subr.mxu0 0.0
        %1206 = vmatpush2.msra.mxu0 0.0
        %1207 = vmatprep.subr.mxu0 0.0
        %1208 = vmatpush2.msra.mxu0 0.0
        %1209 = vmatprep.subr.mxu0 0.0
        %1210 = vmatpush2.msra.mxu0 0.0
        %1211 = vmatprep.subr.mxu0 0.0
        %1212 = vmatpush2.msra.mxu0 0.0
        %1213 = vmatprep.subr.mxu0 0.0
        %1214 = vmatpush2.msra.mxu0 0.0
        %1215 = vmatprep.subr.mxu0 0.0
        %1216 = vmatpush2.msra.mxu0 0.0
        %1217 = vmatprep.subr.mxu0 0.0
        %1218 = vmatpush2.msra.mxu0 0.0
        %1219 = vmatprep.subr.mxu0 0.0
        %1220 = vmatpush2.msra.mxu0 0.0
        %1221 = vmatprep.subr.mxu0 0.0
        %1222 = vmatpush2.msra.mxu0 0.0
        %1223 = vmatprep.subr.mxu0 0.0
        %1224 = vmatpush2.msra.mxu0 0.0
        %1225 = vmatprep.subr.mxu0 0.0
        %1226 = vmatpush2.msra.mxu0 0.0
        %1227 = vmatprep.subr.mxu0 0.0
        %1228 = vmatpush2.msra.mxu0 0.0
        %1229 = vmatprep.subr.mxu0 0.0
        %1230 = vmatpush2.msra.mxu0 0.0
        %1231 = vmatprep.mubr.f32.mxu0 0.0
        %1232 = vmatmul.mubr.f32.gmra.mxu0 %v1067
        %v1233 = vpop.f32.mrf.mxu0
        %v1234 = vadd.f32 %v1049, %v1233
        %v1235 = vpop.f32.mrf.mxu0
        %v1236 = vadd.f32 %v1049, %v1235
        %1237 = vmatprep.mubr.f32.mxu0 0.0
        %1238 = vmatmul.mubr.f32.gmra.mxu0 %v1070
        %v1239 = vpop.f32.mrf.mxu0
        %v1240 = vadd.f32 %v1054, %v1239
        %v1241 = vpop.f32.mrf.mxu0
        %v1242 = vadd.f32 %v1054, %v1241
        %1243 = vmatprep.mubr.f32.mxu0 0.0
        %1244 = vmatmul.mubr.f32.gmra.mxu0 %v1073
        %v1245 = vpop.f32.mrf.mxu0
        %v1246 = vadd.f32 %v1059, %v1245
        %v1247 = vpop.f32.mrf.mxu0
        %v1248 = vadd.f32 %v1059, %v1247
        %1249 = vmatprep.mubr.f32.mxu0 0.0
        %1250 = vmatmul.mubr.f32.gmra.mxu0 %v1076
        %v1251 = vpop.f32.mrf.mxu0
        %v1252 = vadd.f32 %v1064, %v1251
        %v1253 = vpop.f32.mrf.mxu0
        %v1254 = vadd.f32 %v1064, %v1253
        %1255 = vdwg.mxu0
        %v1256 = vtanh.pop %v1145
        %v1257 = vtanh.pop %v1147
        %v1258 = vtanh.pop %v1234
        %v1259 = vtanh.pop %v1236
        %v1260 = vtanh.pop %v1151
        %v1261 = vtanh.pop %v1153
        %v1262 = vtanh.pop %v1240
        %v1263 = vtanh.pop %v1242
        %v1264 = vtanh.pop %v1157
        %v1265 = vtanh.pop %v1159
        %v1266 = vtanh.pop %v1246
        %v1267 = vtanh.pop %v1248
        %v1268 = vtanh.pop %v1163
        %v1269 = vtanh.pop %v1165
        %v1270 = vtanh.pop %v1252
        %v1271 = vtanh.pop %v1254
        %v1272 = vld [vmem:[%s5] sm:$0x1]
        %v1273 = vld [vmem:[#allocation2] sm:$0x1]
        %1275 = vset.pattern.permute.xlu0 0
        %1276 = vperm.xlu0 %1275, %v1273
        %v1277 = vpop.permute.xlu0 %1276
        %v1279 = vlaneseq
        %v1280 = vshrl.u32 %v1279, 7
        %v1281 = vsub.s32 0, %v1280
        %v1282 = vrot.slane %v1277, %v1281
        %v1284 = vsel %vm613, %v1272, 0
        %1286 = vmatprep.subr.mxu0 0.0
        %1287 = vmatpush1.msra.mxu0 0.0
        %1288 = vmatprep.subr.mxu0 0.0
        %1289 = vmatpush1.msra.mxu0 0.0
        %1290 = vmatprep.subr.mxu0 0.0
        %1291 = vmatpush1.msra.mxu0 0.0
        %1292 = vmatprep.subr.mxu0 0.0
        %1293 = vmatpush1.msra.mxu0 0.0
        %1294 = vmatprep.subr.mxu0 0.0
        %1295 = vmatpush1.msra.mxu0 0.0
        %1296 = vmatprep.subr.mxu0 0.0
        %1297 = vmatpush1.msra.mxu0 0.0
        %1298 = vmatprep.subr.mxu0 0.0
        %1299 = vmatpush1.msra.mxu0 0.0
        %1300 = vmatprep.subr.mxu0 0.0
        %1301 = vmatpush1.msra.mxu0 0.0
        %1302 = vmatprep.subr.mxu0 0.0
        %1303 = vmatpush1.msra.mxu0 0.0
        %1304 = vmatprep.subr.mxu0 0.0
        %1305 = vmatpush1.msra.mxu0 0.0
        %1306 = vmatprep.subr.mxu0 0.0
        %1307 = vmatpush1.msra.mxu0 0.0
        %1308 = vmatprep.subr.mxu0 0.0
        %1309 = vmatpush1.msra.mxu0 0.0
        %1310 = vmatprep.subr.mxu0 %v1269
        %1311 = vmatpush1.msra.mxu0 %v1268
        %1312 = vmatprep.subr.mxu0 %v1265
        %1313 = vmatpush1.msra.mxu0 %v1264
        %1314 = vmatprep.subr.mxu0 %v1261
        %1315 = vmatpush1.msra.mxu0 %v1260
        %1316 = vmatprep.subr.mxu0 %v1257
        %1317 = vmatpush1.msra.mxu0 %v1256
        %1318 = vmatprep.subr.mxu0 0.0
        %1319 = vmatpush2.msra.mxu0 0.0
        %1320 = vmatprep.subr.mxu0 0.0
        %1321 = vmatpush2.msra.mxu0 0.0
        %1322 = vmatprep.subr.mxu0 0.0
        %1323 = vmatpush2.msra.mxu0 0.0
        %1324 = vmatprep.subr.mxu0 0.0
        %1325 = vmatpush2.msra.mxu0 0.0
        %1326 = vmatprep.subr.mxu0 0.0
        %1327 = vmatpush2.msra.mxu0 0.0
        %1328 = vmatprep.subr.mxu0 0.0
        %1329 = vmatpush2.msra.mxu0 0.0
        %1330 = vmatprep.subr.mxu0 0.0
        %1331 = vmatpush2.msra.mxu0 0.0
        %1332 = vmatprep.subr.mxu0 0.0
        %1333 = vmatpush2.msra.mxu0 0.0
        %1334 = vmatprep.subr.mxu0 0.0
        %1335 = vmatpush2.msra.mxu0 0.0
        %1336 = vmatprep.subr.mxu0 0.0
        %1337 = vmatpush2.msra.mxu0 0.0
        %1338 = vmatprep.subr.mxu0 0.0
        %1339 = vmatpush2.msra.mxu0 0.0
        %1340 = vmatprep.subr.mxu0 0.0
        %1341 = vmatpush2.msra.mxu0 0.0
        %1342 = vmatprep.subr.mxu0 0.0
        %1343 = vmatpush2.msra.mxu0 0.0
        %1344 = vmatprep.subr.mxu0 0.0
        %1345 = vmatpush2.msra.mxu0 0.0
        %1346 = vmatprep.subr.mxu0 0.0
        %1347 = vmatpush2.msra.mxu0 0.0
        %1348 = vmatprep.subr.mxu0 0.0
        %1349 = vmatpush2.msra.mxu0 0.0
        %1350 = vmatprep.mubr.f32.mxu0 0.0
        %1351 = vmatmul.mubr.f32.gmra.mxu0 %v1284
        %v1352 = vpop.f32.mrf.mxu0
        %v1353 = vadd.f32 %v1282, %v1352
        %v1354 = vpop.f32.mrf.mxu0
        %v1355 = vadd.f32 %v1282, %v1354
        %1356 = vdwg.mxu0
        %1357 = vmatprep.subr.mxu0 0.0
        %1358 = vmatpush1.msra.mxu0 0.0
        %1359 = vmatprep.subr.mxu0 0.0
        %1360 = vmatpush1.msra.mxu0 0.0
        %1361 = vmatprep.subr.mxu0 0.0
        %1362 = vmatpush1.msra.mxu0 0.0
        %1363 = vmatprep.subr.mxu0 0.0
        %1364 = vmatpush1.msra.mxu0 0.0
        %1365 = vmatprep.subr.mxu0 0.0
        %1366 = vmatpush1.msra.mxu0 0.0
        %1367 = vmatprep.subr.mxu0 0.0
        %1368 = vmatpush1.msra.mxu0 0.0
        %1369 = vmatprep.subr.mxu0 0.0
        %1370 = vmatpush1.msra.mxu0 0.0
        %1371 = vmatprep.subr.mxu0 0.0
        %1372 = vmatpush1.msra.mxu0 0.0
        %1373 = vmatprep.subr.mxu0 0.0
        %1374 = vmatpush1.msra.mxu0 0.0
        %1375 = vmatprep.subr.mxu0 0.0
        %1376 = vmatpush1.msra.mxu0 0.0
        %1377 = vmatprep.subr.mxu0 0.0
        %1378 = vmatpush1.msra.mxu0 0.0
        %1379 = vmatprep.subr.mxu0 0.0
        %1380 = vmatpush1.msra.mxu0 0.0
        %1381 = vmatprep.subr.mxu0 %v1271
        %1382 = vmatpush1.msra.mxu0 %v1270
        %1383 = vmatprep.subr.mxu0 %v1267
        %1384 = vmatpush1.msra.mxu0 %v1266
        %1385 = vmatprep.subr.mxu0 %v1263
        %1386 = vmatpush1.msra.mxu0 %v1262
        %1387 = vmatprep.subr.mxu0 %v1259
        %1388 = vmatpush1.msra.mxu0 %v1258
        %1389 = vmatprep.subr.mxu0 0.0
        %1390 = vmatpush2.msra.mxu0 0.0
        %1391 = vmatprep.subr.mxu0 0.0
        %1392 = vmatpush2.msra.mxu0 0.0
        %1393 = vmatprep.subr.mxu0 0.0
        %1394 = vmatpush2.msra.mxu0 0.0
        %1395 = vmatprep.subr.mxu0 0.0
        %1396 = vmatpush2.msra.mxu0 0.0
        %1397 = vmatprep.subr.mxu0 0.0
        %1398 = vmatpush2.msra.mxu0 0.0
        %1399 = vmatprep.subr.mxu0 0.0
        %1400 = vmatpush2.msra.mxu0 0.0
        %1401 = vmatprep.subr.mxu0 0.0
        %1402 = vmatpush2.msra.mxu0 0.0
        %1403 = vmatprep.subr.mxu0 0.0
        %1404 = vmatpush2.msra.mxu0 0.0
        %1405 = vmatprep.subr.mxu0 0.0
        %1406 = vmatpush2.msra.mxu0 0.0
        %1407 = vmatprep.subr.mxu0 0.0
        %1408 = vmatpush2.msra.mxu0 0.0
        %1409 = vmatprep.subr.mxu0 0.0
        %1410 = vmatpush2.msra.mxu0 0.0
        %1411 = vmatprep.subr.mxu0 0.0
        %1412 = vmatpush2.msra.mxu0 0.0
        %1413 = vmatprep.subr.mxu0 0.0
        %1414 = vmatpush2.msra.mxu0 0.0
        %1415 = vmatprep.subr.mxu0 0.0
        %1416 = vmatpush2.msra.mxu0 0.0
        %1417 = vmatprep.subr.mxu0 0.0
        %1418 = vmatpush2.msra.mxu0 0.0
        %1419 = vmatprep.subr.mxu0 0.0
        %1420 = vmatpush2.msra.mxu0 0.0
        %1421 = vmatprep.mubr.f32.mxu0 0.0
        %1422 = vmatmul.mubr.f32.gmra.mxu0 %v1284
        %v1423 = vpop.f32.mrf.mxu0
        %v1424 = vadd.f32 %v1282, %v1423
        %v1425 = vpop.f32.mrf.mxu0
        %v1426 = vadd.f32 %v1282, %v1425
        %1427 = vdwg.mxu0
        %v1432 = vcombine.low %v1353, %v1355
        %v1433 = vcombine.low %v1424, %v1426
        %v1435 = vunpack.c.l.s4 1966171168
        %v1436 = vunpack.c.0.s8 %v1435
        %v1437 = vlaneseq
        %v1438 = vshrl.u32 %v1437, 7
        %v1439 = vsub.s32 %v1436, %v1438
        %v1440 = vrot.slane %v1432, %v1439
        %v1442 = vunpack.c.l.s4 1966171168
        %v1443 = vunpack.c.0.s8 %v1442
        %v1444 = vlaneseq
        %v1445 = vshrl.u32 %v1444, 7
        %v1446 = vsub.s32 %v1443, %v1445
        %v1447 = vrot.slane %v1433, %v1446
        %v1448 = vcombine.low %v1440, %v1447
        %v1450 = vunpack.c.l.s4 1966171168
        %v1451 = vunpack.c.0.s8 %v1450
        %v1452 = vlaneseq
        %v1453 = vshrl.u32 %v1452, 7
        %v1454 = vsub.s32 %v1451, %v1453
        %v1455 = vrot.slane %v1448, %v1454
        %v1457 = vlaneseq
        %vm1458 = vcmp.ge.s32.totalorder %v1457, 0
        %vm1459 = vcmp.lt.s32.totalorder %v1457, 512
        %vm1460 = vmand %vm1458, %vm1459
        %1461 = vst.msk [vmem:[%s286] sm:$0xf] %vm1460, %v1455
        %s1462 = sand.u32 %s183, 1
        %s1463 = scalar_lea.sflag [#allocation4], %s1462
        %s1464 = sand.u32 %s183, 1
        %s1465 = smul.addr %s1464, 4
        %s1466 = scalar_lea.vmem [#allocation3], %s1465
        // Predicated region
        $region49: #{pinn_forward.1} parent=47 // pred_check
          %p1467 = pneg %p193
        $region50: #{pinn_forward.1} parent=47 // pred_check_branch
          %1469 = sbr.rel (%p1467) target = $region52
        $region51: #{pinn_forward.1} parent=47 // pred_region
          %s1470 = smul.u32 4, %s23
          %s1471 = ssub.s32 5, %s1470
          %p1472 = scmp.lt.s32.totalorder %s1471, 4
          %s1473 = scalar_select %p1472, %s1471, 4
          %s1474 = smul.u32 16, %s1473
          %s1476 = ssub.s32 64, %s1474
          %1477 = vsyncadd %s1463, %s1476
          %p1478 = scmp.ne.s32.totalorder 0, %s1474
          %s1479 = smul.addr %s1470, 16
          %s1480 = scalar_lea.hbm %s7, %s1479
          %s1481 = sshll.u32 %s1473, 4
          %s1482 = sshll.u32 %s1466, 4
          %s1483 = int_to_ptr.vmem [resolvable:$true] %s1482
          %1485 = dma.vmem_to_hbm [thread:$0]  (%p1478), %s1483, %s1481, %s1480, %s1463
        $region52: #{pinn_forward.1} parent=47 // pred_fallthru
          _
      $region48: #{pinn_forward.1} parent=5 // pred_fallthru
        _
      %p1486 = scmp.le.s32.totalorder 2, %s18
      // Predicated region
      $region53: #{pinn_forward.1} parent=5 // pred_check
        %p1487 = pneg %p1486
      $region54: #{pinn_forward.1} parent=5 // pred_check_branch
        %1489 = sbr.rel (%p1487) target = $region56
      $region55: #{pinn_forward.1} parent=5 // pred_region
        %s1490 = ssub.s32 %s18, 2
        // Predicated region
        $region57: #{pinn_forward.1} parent=55 // pred_check
          %p1491 = pneg %p199
        $region58: #{pinn_forward.1} parent=55 // pred_check_branch
          %1493 = sbr.rel (%p1491) target = $region60
        $region59: #{pinn_forward.1} parent=55 // pred_region
          %s1494 = sand.u32 %s184, 1
          %s1495 = scalar_lea.sflag [#allocation4], %s1494
          %s1496 = sand.u32 %s184, 1
          %s1497 = smul.addr %s1496, 4
          %s1498 = scalar_lea.vmem [#allocation3], %s1497
          %1499 = dma.done %s1495, 64
        $region60: #{pinn_forward.1} parent=55 // pred_fallthru
          _
      $region56: #{pinn_forward.1} parent=5 // pred_fallthru
        _
    $region6: #{pinn_forward.1} parent=1 // loop_footer
      %s22 = sadd.s32 1, %s18
    $region7: #{pinn_forward.1} parent=1 // loop_footer_branch
      %17 = sbr.rel target = $region3
    $region8: #{pinn_forward.1} parent=1 // loop_exit
      _
    %1500 = vsyncpa [#allocation4], 1
    %s1501 = scalar_lea.sflag [#allocation4], 1
    %1502 = vsyncpa %s1501, 1

</llo_original>
